<compile_context>
chip_gen: v7x
topology: tpu7x:2x2x1
jax: 0.10.0
libtpu: 0.0.40
codegen_flags: <defaults>
</compile_context>

<pallas_src>
import functools

import jax
import jax.numpy as jnp
from jax.experimental import pallas as pl
from jax.experimental.pallas import tpu as pltpu

_LANES = 128


def _round_up(x, m):
    return (x + m - 1) // m * m


def _pick_h_tile(h_out, w_out, cpad, budget_bytes=4 << 20):
    """Largest divisor of h_out whose f32 output tile fits the budget,
    preferring >= 2 tiles along H (pipelining / multi-core sharding)."""
    divisors = [d for d in range(1, h_out + 1) if h_out % d == 0]
    fitting = [d for d in divisors if d * w_out * cpad * 4 <= budget_bytes] or [1]
    th = fitting[-1]
    if th == h_out and h_out > 1 and len(fitting) > 1:
        th = fitting[-2]
    return th


def _aspp_kernel(x_ref, w_ref, b_ref, o_ref, *, th, w_out, kh_sz, kw_sz,
                 dil, cin, cpad):
    # x_ref : (1, Hp, Wp, Cin)        padded input image, bf16 (resident per n)
    # w_ref : (KH*KW, Cin, Cout_pad)  BN-scale-folded conv weight, bf16
    # b_ref : (1, Cout_pad)           fused BN bias, f32
    # o_ref : (1, TH, W_out, Cout_pad) f32
    h = pl.program_id(1)
    row0 = h * th

    acc = jnp.zeros((th * w_out, cpad), jnp.float32)
    for kh in range(kh_sz):
        for kw in range(kw_sz):
            patch = x_ref[0, pl.ds(row0 + kh * dil, th),
                          kw * dil:kw * dil + w_out, :]          # (TH, W, Cin)
            acc = acc + jnp.dot(patch.reshape(th * w_out, cin),  # M = TH*W
                                w_ref[kh * kw_sz + kw],          # (Cin, Cpad)
                                preferred_element_type=jnp.float32)

    y = jnp.maximum(acc + b_ref[...], 0.0)                       # bias + ReLU
    o_ref[0] = y.reshape(th, w_out, cpad).astype(o_ref.dtype)


def aspp_forward(x_nchw, weight_oihw, gamma, beta, running_mean, running_var,
                 *, padding, dilation, eps=1e-5):
    N, Cin, H, W = x_nchw.shape
    Cout, _, KH, KW = weight_oihw.shape
    H_out = H + 2 * padding - dilation * (KH - 1)
    W_out = W + 2 * padding - dilation * (KW - 1)

    x = jnp.transpose(x_nchw, (0, 2, 3, 1)).astype(jnp.float32)      # NHWC
    xpad = jnp.pad(x, ((0, 0), (padding, padding), (padding, padding), (0, 0)))
    xpad = xpad.astype(jnp.bfloat16)                                  # halve DMA bytes
    Hp, Wp = int(xpad.shape[1]), int(xpad.shape[2])

    # Inference-mode BatchNorm fused: scale folded into the conv weight,
    # bias kept as the only in-kernel epilogue term.
    scale = (gamma / jnp.sqrt(running_var + eps)).astype(jnp.float32)
    bias = (beta - running_mean * scale).astype(jnp.float32)

    Cpad = _round_up(Cout, _LANES)                                    # lane-dense out
    w = jnp.transpose(weight_oihw, (2, 3, 1, 0)).astype(jnp.float32)  # (KH,KW,Cin,Cout)
    w = w * scale[None, None, None, :]
    w = w.reshape(KH * KW, Cin, Cout)
    w = jnp.pad(w, ((0, 0), (0, 0), (0, Cpad - Cout))).astype(jnp.bfloat16)
    b = jnp.pad(bias, (0, Cpad - Cout)).reshape(1, Cpad)

    TH = _pick_h_tile(H_out, W_out, Cpad)
    n_h = H_out // TH

    kernel = functools.partial(_aspp_kernel, th=TH, w_out=W_out, kh_sz=KH,
                               kw_sz=KW, dil=dilation, cin=Cin, cpad=Cpad)

    # VMEM budget: 2x double-buffered bf16 input image + 2x f32 output tile
    # + bf16 weight + f32 accumulator-sized slack.  Clamped for v7x (64 MiB).
    in_blk = Hp * Wp * Cin * 2
    out_blk = TH * W_out * Cpad * 4
    w_bytes = KH * KW * Cin * Cpad * 2
    vmem_limit = int(min(max(2 * in_blk + 3 * out_blk + 2 * w_bytes + (2 << 20),
                             32 << 20), 64 << 20))

    out = pl.pallas_call(
        kernel,
        out_shape=jax.ShapeDtypeStruct((N, H_out, W_out, Cpad), jnp.float32),
        grid_spec=pltpu.PrefetchScalarGridSpec(
            num_scalar_prefetch=0,
            grid=(N, n_h),
            in_specs=[
                pl.BlockSpec((1, Hp, Wp, Cin), lambda n, h: (n, 0, 0, 0)),
                pl.BlockSpec((KH * KW, Cin, Cpad), lambda n, h: (0, 0, 0)),
                pl.BlockSpec((1, Cpad), lambda n, h: (0, 0)),
            ],
            out_specs=pl.BlockSpec((1, TH, W_out, Cpad),
                                   lambda n, h: (n, h, 0, 0)),
        ),
        compiler_params=pltpu.CompilerParams(
            dimension_semantics=("parallel", "parallel"),
            vmem_limit_bytes=vmem_limit),
    )(xpad, w, b)

    out = out[..., :Cout]                       # drop lane padding
    return jnp.transpose(out, (0, 3, 1, 2))     # back to NCHW


if __name__ == "__main__":
    key = jax.random.PRNGKey(0)
    N, Cin, H, W = 2, 4, 16, 16
    Cout, K, pad, dil = 8, 3, 2, 2              # typical ASPP branch: k=3, pad=dilation

    kx, kw_, km, kv = jax.random.split(key, 4)
    x = jax.random.normal(kx, (N, Cin, H, W), jnp.float32)

    # kaiming_normal_ (fan_in mode, gain=sqrt(2)) on the conv weight
    fan_in = Cin * K * K
    std = (2.0 / fan_in) ** 0.5
    weight = jax.random.normal(kw_, (Cout, Cin, K, K), jnp.float32) * std

    # BatchNorm params as in _init_weight (gamma=1, beta=0); non-trivial
    # running stats so the fused scale/bias path is actually exercised.
    gamma = jnp.ones((Cout,), jnp.float32)
    beta = jnp.zeros((Cout,), jnp.float32)
    running_mean = 0.1 * jax.random.normal(km, (Cout,), jnp.float32)
    running_var = jax.random.uniform(kv, (Cout,), jnp.float32, 0.5, 1.5)

    out = aspp_forward(x, weight, gamma, beta, running_mean, running_var,
                       padding=pad, dilation=dil)
    out = jax.block_until_ready(out)

    # plain-JAX reference check (conv -> BN(inference) -> ReLU), full f32
    x_nhwc = jnp.transpose(x, (0, 2, 3, 1))
    w_hwio = jnp.transpose(weight, (2, 3, 1, 0))
    y = jax.lax.conv_general_dilated(
        x_nhwc, w_hwio, (1, 1), [(pad, pad), (pad, pad)],
        rhs_dilation=(dil, dil),
        dimension_numbers=("NHWC", "HWIO", "NHWC"))
    eps = 1e-5
    ref_scale = gamma / jnp.sqrt(running_var + eps)
    ref_bias = beta - running_mean * ref_scale
    y = jnp.maximum(y * ref_scale + ref_bias, 0.0)
    y = jnp.transpose(y, (0, 3, 1, 2))

    assert out.shape == (N, Cout, H, W)
    max_err = float(jnp.max(jnp.abs(out - y)))
    # bf16 operands + f32 accumulation on the MXU vs. a full-f32 reference
    # -> bf16-level rounding error.
    assert jnp.allclose(out, y, atol=3e-2, rtol=3e-2), max_err
    print("KERNEL_OK")
</pallas_src>

<mosaic_0001>
module attributes {stable_mosaic.version = 11 : i64} {
  func.func @_aspp_kernel(%arg0: i32, %arg1: i32, %arg2: memref<1x20x20x4xbf16, #tpu.memory_space<vmem>>, %arg3: memref<9x4x128xbf16, #tpu.memory_space<vmem>>, %arg4: memref<1x128xf32, #tpu.memory_space<vmem>>, %arg5: memref<1x8x16x128xf32, #tpu.memory_space<vmem>>) attributes {dimension_semantics = [#tpu.dimension_semantics<parallel>, #tpu.dimension_semantics<parallel>], iteration_bounds = array<i64: 2, 2>, scalar_prefetch = 0 : i64, scratch_operands = 0 : i64, tpu.core_type = #tpu.core_type<tc>, window_params = [{transform_indices = @transform_0, window_bounds = array<i64: 1, 20, 20, 4>}, {pipeline_mode = #tpu.pipeline_mode<synchronous>, transform_indices = @transform_1, window_bounds = array<i64: 9, 4, 128>}, {pipeline_mode = #tpu.pipeline_mode<synchronous>, transform_indices = @transform_2, window_bounds = array<i64: 1, 128>}, {transform_indices = @transform_3, window_bounds = array<i64: 1, 8, 16, 128>}]} {
    %c8_i32 = arith.constant 8 : i32
    %0 = arith.muli %arg1, %c8_i32 : i32
    %cst = arith.constant 0.000000e+00 : f32
    %1 = vector.broadcast %cst : f32 to vector<128x128xf32>
    %c0_i32 = arith.constant 0 : i32
    %2 = arith.addi %0, %c0_i32 : i32
    %c0 = arith.constant 0 : index
    %3 = arith.index_cast %2 : i32 to index
    %c0_0 = arith.constant 0 : index
    %c0_1 = arith.constant 0 : index
    %4 = vector.load %arg2[%c0, %3, %c0_0, %c0_1] : memref<1x20x20x4xbf16, #tpu.memory_space<vmem>>, vector<1x8x16x4xbf16>
    %5 = vector.shape_cast %4 : vector<1x8x16x4xbf16> to vector<8x16x4xbf16>
    %6 = vector.shape_cast %5 : vector<8x16x4xbf16> to vector<128x4xbf16>
    %c0_2 = arith.constant 0 : index
    %c0_3 = arith.constant 0 : index
    %c0_4 = arith.constant 0 : index
    %7 = vector.load %arg3[%c0_2, %c0_3, %c0_4] : memref<9x4x128xbf16, #tpu.memory_space<vmem>>, vector<1x4x128xbf16>
    %8 = vector.shape_cast %7 : vector<1x4x128xbf16> to vector<4x128xbf16>
    %cst_5 = arith.constant dense<0.000000e+00> : vector<128x128xf32>
    %9 = tpu.matmul %6, %8, %cst_5 {dimension_numbers = #tpu.dot_dimension_numbers<[1], [0], [0], [1], [0, 0, 1, 1], [], []>} : vector<128x4xbf16>, vector<4x128xbf16>, vector<128x128xf32> -> vector<128x128xf32>
    %10 = arith.addf %1, %9 : vector<128x128xf32>
    %c0_i32_6 = arith.constant 0 : i32
    %11 = arith.addi %0, %c0_i32_6 : i32
    %c0_7 = arith.constant 0 : index
    %12 = arith.index_cast %11 : i32 to index
    %c2 = arith.constant 2 : index
    %c0_8 = arith.constant 0 : index
    %13 = vector.load %arg2[%c0_7, %12, %c2, %c0_8] : memref<1x20x20x4xbf16, #tpu.memory_space<vmem>>, vector<1x8x16x4xbf16>
    %14 = vector.shape_cast %13 : vector<1x8x16x4xbf16> to vector<8x16x4xbf16>
    %15 = vector.shape_cast %14 : vector<8x16x4xbf16> to vector<128x4xbf16>
    %c1 = arith.constant 1 : index
    %c0_9 = arith.constant 0 : index
    %c0_10 = arith.constant 0 : index
    %16 = vector.load %arg3[%c1, %c0_9, %c0_10] : memref<9x4x128xbf16, #tpu.memory_space<vmem>>, vector<1x4x128xbf16>
    %17 = vector.shape_cast %16 : vector<1x4x128xbf16> to vector<4x128xbf16>
    %cst_11 = arith.constant dense<0.000000e+00> : vector<128x128xf32>
    %18 = tpu.matmul %15, %17, %cst_11 {dimension_numbers = #tpu.dot_dimension_numbers<[1], [0], [0], [1], [0, 0, 1, 1], [], []>} : vector<128x4xbf16>, vector<4x128xbf16>, vector<128x128xf32> -> vector<128x128xf32>
    %19 = arith.addf %10, %18 : vector<128x128xf32>
    %c0_i32_12 = arith.constant 0 : i32
    %20 = arith.addi %0, %c0_i32_12 : i32
    %c0_13 = arith.constant 0 : index
    %21 = arith.index_cast %20 : i32 to index
    %c4 = arith.constant 4 : index
    %c0_14 = arith.constant 0 : index
    %22 = vector.load %arg2[%c0_13, %21, %c4, %c0_14] : memref<1x20x20x4xbf16, #tpu.memory_space<vmem>>, vector<1x8x16x4xbf16>
    %23 = vector.shape_cast %22 : vector<1x8x16x4xbf16> to vector<8x16x4xbf16>
    %24 = vector.shape_cast %23 : vector<8x16x4xbf16> to vector<128x4xbf16>
    %c2_15 = arith.constant 2 : index
    %c0_16 = arith.constant 0 : index
    %c0_17 = arith.constant 0 : index
    %25 = vector.load %arg3[%c2_15, %c0_16, %c0_17] : memref<9x4x128xbf16, #tpu.memory_space<vmem>>, vector<1x4x128xbf16>
    %26 = vector.shape_cast %25 : vector<1x4x128xbf16> to vector<4x128xbf16>
    %cst_18 = arith.constant dense<0.000000e+00> : vector<128x128xf32>
    %27 = tpu.matmul %24, %26, %cst_18 {dimension_numbers = #tpu.dot_dimension_numbers<[1], [0], [0], [1], [0, 0, 1, 1], [], []>} : vector<128x4xbf16>, vector<4x128xbf16>, vector<128x128xf32> -> vector<128x128xf32>
    %28 = arith.addf %19, %27 : vector<128x128xf32>
    %c2_i32 = arith.constant 2 : i32
    %29 = arith.addi %0, %c2_i32 : i32
    %c0_19 = arith.constant 0 : index
    %30 = arith.index_cast %29 : i32 to index
    %c0_20 = arith.constant 0 : index
    %c0_21 = arith.constant 0 : index
    %31 = vector.load %arg2[%c0_19, %30, %c0_20, %c0_21] : memref<1x20x20x4xbf16, #tpu.memory_space<vmem>>, vector<1x8x16x4xbf16>
    %32 = vector.shape_cast %31 : vector<1x8x16x4xbf16> to vector<8x16x4xbf16>
    %33 = vector.shape_cast %32 : vector<8x16x4xbf16> to vector<128x4xbf16>
    %c3 = arith.constant 3 : index
    %c0_22 = arith.constant 0 : index
    %c0_23 = arith.constant 0 : index
    %34 = vector.load %arg3[%c3, %c0_22, %c0_23] : memref<9x4x128xbf16, #tpu.memory_space<vmem>>, vector<1x4x128xbf16>
    %35 = vector.shape_cast %34 : vector<1x4x128xbf16> to vector<4x128xbf16>
    %cst_24 = arith.constant dense<0.000000e+00> : vector<128x128xf32>
    %36 = tpu.matmul %33, %35, %cst_24 {dimension_numbers = #tpu.dot_dimension_numbers<[1], [0], [0], [1], [0, 0, 1, 1], [], []>} : vector<128x4xbf16>, vector<4x128xbf16>, vector<128x128xf32> -> vector<128x128xf32>
    %37 = arith.addf %28, %36 : vector<128x128xf32>
    %c2_i32_25 = arith.constant 2 : i32
    %38 = arith.addi %0, %c2_i32_25 : i32
    %c0_26 = arith.constant 0 : index
    %39 = arith.index_cast %38 : i32 to index
    %c2_27 = arith.constant 2 : index
    %c0_28 = arith.constant 0 : index
    %40 = vector.load %arg2[%c0_26, %39, %c2_27, %c0_28] : memref<1x20x20x4xbf16, #tpu.memory_space<vmem>>, vector<1x8x16x4xbf16>
    %41 = vector.shape_cast %40 : vector<1x8x16x4xbf16> to vector<8x16x4xbf16>
    %42 = vector.shape_cast %41 : vector<8x16x4xbf16> to vector<128x4xbf16>
    %c4_29 = arith.constant 4 : index
    %c0_30 = arith.constant 0 : index
    %c0_31 = arith.constant 0 : index
    %43 = vector.load %arg3[%c4_29, %c0_30, %c0_31] : memref<9x4x128xbf16, #tpu.memory_space<vmem>>, vector<1x4x128xbf16>
    %44 = vector.shape_cast %43 : vector<1x4x128xbf16> to vector<4x128xbf16>
    %cst_32 = arith.constant dense<0.000000e+00> : vector<128x128xf32>
    %45 = tpu.matmul %42, %44, %cst_32 {dimension_numbers = #tpu.dot_dimension_numbers<[1], [0], [0], [1], [0, 0, 1, 1], [], []>} : vector<128x4xbf16>, vector<4x128xbf16>, vector<128x128xf32> -> vector<128x128xf32>
    %46 = arith.addf %37, %45 : vector<128x128xf32>
    %c2_i32_33 = arith.constant 2 : i32
    %47 = arith.addi %0, %c2_i32_33 : i32
    %c0_34 = arith.constant 0 : index
    %48 = arith.index_cast %47 : i32 to index
    %c4_35 = arith.constant 4 : index
    %c0_36 = arith.constant 0 : index
    %49 = vector.load %arg2[%c0_34, %48, %c4_35, %c0_36] : memref<1x20x20x4xbf16, #tpu.memory_space<vmem>>, vector<1x8x16x4xbf16>
    %50 = vector.shape_cast %49 : vector<1x8x16x4xbf16> to vector<8x16x4xbf16>
    %51 = vector.shape_cast %50 : vector<8x16x4xbf16> to vector<128x4xbf16>
    %c5 = arith.constant 5 : index
    %c0_37 = arith.constant 0 : index
    %c0_38 = arith.constant 0 : index
    %52 = vector.load %arg3[%c5, %c0_37, %c0_38] : memref<9x4x128xbf16, #tpu.memory_space<vmem>>, vector<1x4x128xbf16>
    %53 = vector.shape_cast %52 : vector<1x4x128xbf16> to vector<4x128xbf16>
    %cst_39 = arith.constant dense<0.000000e+00> : vector<128x128xf32>
    %54 = tpu.matmul %51, %53, %cst_39 {dimension_numbers = #tpu.dot_dimension_numbers<[1], [0], [0], [1], [0, 0, 1, 1], [], []>} : vector<128x4xbf16>, vector<4x128xbf16>, vector<128x128xf32> -> vector<128x128xf32>
    %55 = arith.addf %46, %54 : vector<128x128xf32>
    %c4_i32 = arith.constant 4 : i32
    %56 = arith.addi %0, %c4_i32 : i32
    %c0_40 = arith.constant 0 : index
    %57 = arith.index_cast %56 : i32 to index
    %c0_41 = arith.constant 0 : index
    %c0_42 = arith.constant 0 : index
    %58 = vector.load %arg2[%c0_40, %57, %c0_41, %c0_42] : memref<1x20x20x4xbf16, #tpu.memory_space<vmem>>, vector<1x8x16x4xbf16>
    %59 = vector.shape_cast %58 : vector<1x8x16x4xbf16> to vector<8x16x4xbf16>
    %60 = vector.shape_cast %59 : vector<8x16x4xbf16> to vector<128x4xbf16>
    %c6 = arith.constant 6 : index
    %c0_43 = arith.constant 0 : index
    %c0_44 = arith.constant 0 : index
    %61 = vector.load %arg3[%c6, %c0_43, %c0_44] : memref<9x4x128xbf16, #tpu.memory_space<vmem>>, vector<1x4x128xbf16>
    %62 = vector.shape_cast %61 : vector<1x4x128xbf16> to vector<4x128xbf16>
    %cst_45 = arith.constant dense<0.000000e+00> : vector<128x128xf32>
    %63 = tpu.matmul %60, %62, %cst_45 {dimension_numbers = #tpu.dot_dimension_numbers<[1], [0], [0], [1], [0, 0, 1, 1], [], []>} : vector<128x4xbf16>, vector<4x128xbf16>, vector<128x128xf32> -> vector<128x128xf32>
    %64 = arith.addf %55, %63 : vector<128x128xf32>
    %c4_i32_46 = arith.constant 4 : i32
    %65 = arith.addi %0, %c4_i32_46 : i32
    %c0_47 = arith.constant 0 : index
    %66 = arith.index_cast %65 : i32 to index
    %c2_48 = arith.constant 2 : index
    %c0_49 = arith.constant 0 : index
    %67 = vector.load %arg2[%c0_47, %66, %c2_48, %c0_49] : memref<1x20x20x4xbf16, #tpu.memory_space<vmem>>, vector<1x8x16x4xbf16>
    %68 = vector.shape_cast %67 : vector<1x8x16x4xbf16> to vector<8x16x4xbf16>
    %69 = vector.shape_cast %68 : vector<8x16x4xbf16> to vector<128x4xbf16>
    %c7 = arith.constant 7 : index
    %c0_50 = arith.constant 0 : index
    %c0_51 = arith.constant 0 : index
    %70 = vector.load %arg3[%c7, %c0_50, %c0_51] : memref<9x4x128xbf16, #tpu.memory_space<vmem>>, vector<1x4x128xbf16>
    %71 = vector.shape_cast %70 : vector<1x4x128xbf16> to vector<4x128xbf16>
    %cst_52 = arith.constant dense<0.000000e+00> : vector<128x128xf32>
    %72 = tpu.matmul %69, %71, %cst_52 {dimension_numbers = #tpu.dot_dimension_numbers<[1], [0], [0], [1], [0, 0, 1, 1], [], []>} : vector<128x4xbf16>, vector<4x128xbf16>, vector<128x128xf32> -> vector<128x128xf32>
    %73 = arith.addf %64, %72 : vector<128x128xf32>
    %c4_i32_53 = arith.constant 4 : i32
    %74 = arith.addi %0, %c4_i32_53 : i32
    %c0_54 = arith.constant 0 : index
    %75 = arith.index_cast %74 : i32 to index
    %c4_55 = arith.constant 4 : index
    %c0_56 = arith.constant 0 : index
    %76 = vector.load %arg2[%c0_54, %75, %c4_55, %c0_56] : memref<1x20x20x4xbf16, #tpu.memory_space<vmem>>, vector<1x8x16x4xbf16>
    %77 = vector.shape_cast %76 : vector<1x8x16x4xbf16> to vector<8x16x4xbf16>
    %78 = vector.shape_cast %77 : vector<8x16x4xbf16> to vector<128x4xbf16>
    %c8 = arith.constant 8 : index
    %c0_57 = arith.constant 0 : index
    %c0_58 = arith.constant 0 : index
    %79 = vector.load %arg3[%c8, %c0_57, %c0_58] : memref<9x4x128xbf16, #tpu.memory_space<vmem>>, vector<1x4x128xbf16>
    %80 = vector.shape_cast %79 : vector<1x4x128xbf16> to vector<4x128xbf16>
    %cst_59 = arith.constant dense<0.000000e+00> : vector<128x128xf32>
    %81 = tpu.matmul %78, %80, %cst_59 {dimension_numbers = #tpu.dot_dimension_numbers<[1], [0], [0], [1], [0, 0, 1, 1], [], []>} : vector<128x4xbf16>, vector<4x128xbf16>, vector<128x128xf32> -> vector<128x128xf32>
    %82 = arith.addf %73, %81 : vector<128x128xf32>
    %c0_60 = arith.constant 0 : index
    %c0_61 = arith.constant 0 : index
    %83 = vector.load %arg4[%c0_60, %c0_61] : memref<1x128xf32, #tpu.memory_space<vmem>>, vector<1x128xf32>
    %84 = vector.broadcast %83 : vector<1x128xf32> to vector<128x128xf32>
    %85 = arith.addf %82, %84 : vector<128x128xf32>
    %cst_62 = arith.constant 0.000000e+00 : f32
    %86 = vector.broadcast %cst_62 : f32 to vector<128x128xf32>
    %87 = arith.maximumf %85, %86 : vector<128x128xf32>
    %88 = vector.shape_cast %87 : vector<128x128xf32> to vector<8x16x128xf32>
    %c0_63 = arith.constant 0 : index
    %c0_64 = arith.constant 0 : index
    %c0_65 = arith.constant 0 : index
    %c0_66 = arith.constant 0 : index
    %89 = vector.load %arg5[%c0_63, %c0_64, %c0_65, %c0_66] : memref<1x8x16x128xf32, #tpu.memory_space<vmem>>, vector<1x8x16x128xf32>
    %90 = vector.shape_cast %89 : vector<1x8x16x128xf32> to vector<8x16x128xf32>
    %91 = vector.shape_cast %88 : vector<8x16x128xf32> to vector<1x8x16x128xf32>
    tpu.vector_store %arg5[%c0_63, %c0_64, %c0_65, %c0_66], %91 {strides = array<i32>} : memref<1x8x16x128xf32, #tpu.memory_space<vmem>>, vector<1x8x16x128xf32>,
    return
  }
  func.func @transform_0(%arg0: i32, %arg1: i32) -> (i32, i32, i32, i32) {
    %c0_i32 = arith.constant 0 : i32
    %c0_i32_0 = arith.constant 0 : i32
    %c0_i32_1 = arith.constant 0 : i32
    %c0_i32_2 = arith.constant 0 : i32
    return %arg0, %c0_i32, %c0_i32_0, %c0_i32_1 : i32, i32, i32, i32
  }
  func.func @transform_1(%arg0: i32, %arg1: i32) -> (i32, i32, i32) {
    %c0_i32 = arith.constant 0 : i32
    %c0_i32_0 = arith.constant 0 : i32
    %c0_i32_1 = arith.constant 0 : i32
    %c0_i32_2 = arith.constant 0 : i32
    return %c0_i32, %c0_i32_0, %c0_i32_1 : i32, i32, i32
  }
  func.func @transform_2(%arg0: i32, %arg1: i32) -> (i32, i32) {
    %c0_i32 = arith.constant 0 : i32
    %c0_i32_0 = arith.constant 0 : i32
    %c0_i32_1 = arith.constant 0 : i32
    return %c0_i32, %c0_i32_0 : i32, i32
  }
  func.func @transform_3(%arg0: i32, %arg1: i32) -> (i32, i32, i32, i32) {
    %c0_i32 = arith.constant 0 : i32
    %c0_i32_0 = arith.constant 0 : i32
    %c0_i32_1 = arith.constant 0 : i32
    return %arg0, %arg1, %c0_i32, %c0_i32_0 : i32, i32, i32, i32
  }
}

</mosaic_0001>

<llo_original>
// kernel: tpu_custom_call.1
$region0: #{tpu_custom_call.1}
  #allocation0 [shape = 'u32[]', space=smem, size = 0x4, offset = 0x4, fixed_abs, tag = 'smem constant byte address 0x4 - core index']
  #allocation1 [shape = 'u32[144,128]{1,0:T(1,128)}', space=vmem, size = 0x12000, scoped, tag = 'internal scratch']
  %s0 = inlined_call_operand.vmem [shape: bf16[2,20,20,4], index: 0, kind: input, shape index: {}]
  %s1 = inlined_call_operand.vmem [shape: bf16[9,4,128], index: 1, kind: input, shape index: {}]
  %s2 = inlined_call_operand.vmem [shape: f32[1,128], index: 2, kind: input, shape index: {}]
  %s3 = inlined_call_operand.hbm [shape: f32[2,16,16,128], index: 3, kind: output, shape index: {}]
  %s4 = sld [smem:[#allocation0]]
  $region45: #{tpu_custom_call.1} parent=0
    _
  %s6 = ssub.s32 1, %s4
  %s7 = scalar_select 0, %s6, %s4
  $region1: #{tpu_custom_call.1} parent=0
    #allocation2 [shape = 'u8[131072]{0}', space=vmem, size = 0x20000, scoped, tag = 'output window, operand 0']
    #allocation3 [shape = 's32[2]{0}', space=sflag, size = 0x8, scoped, tag = 'scoped memory for tpu_custom_call.1']
    %8 = vsyncpa [#allocation3], 0
    %s9 = scalar_lea.sflag [#allocation3], 1
    %10 = vsyncpa %s9, 0
    loop: start=0, step=1, limit=6
    $region2: #{tpu_custom_call.1} parent=1 // loop_pre_header
      _
    $region3: #{tpu_custom_call.1} parent=1 // loop_header
      %s12 = sphi 0, %s16
      %p13 = scmp.ge.s32.totalorder %s12, 6
      %s19 = sphi 0, %s31
      %s20 = sphi 0, %s27
      %s21 = sphi 0, %s19
      %s22 = sphi 0, %s20
      %s23 = sphi 0, %s21
      %s24 = sphi 0, %s22
      %s34 = sphi 0, %s36
      %s37 = sphi 0, %s34
      %s38 = sphi 0, %s37
      %s54 = sphi 0, %s38
      %s58 = sphi 0, %s58
      %s60 = sphi 0, %s58
      %s61 = sphi 0, %s60
      %s75 = sphi 0, %s61
      %s79 = sphi 0, %s79
      %s81 = sphi 0, %s79
      %s82 = sphi 0, %s81
      %s96 = sphi 0, %s82
      %s104 = sphi 0, %s106
      %s107 = sphi 0, %s104
      %s108 = sphi 0, %s107
      %s124 = sphi 0, %s108
    $region4: #{tpu_custom_call.1} parent=1 // loop_header_branch
      %15 = sbr.rel (%p13) target = $region8
    $region5: #{tpu_custom_call.1} parent=1 // loop_body
      %s17 = ssub.s32 %s12, 1
      %s18 = ssub.s32 %s12, 2
      %s25 = sadd.s32 1, %s20
      %p26 = scmp.ge.s32.totalorder %s25, 2
      %s27 = scalar_select %p26, 0, %s25
      %s28 = sadd.s32 1, %s19
      %s29 = scalar_select %p26, %s28, %s19
      %p30 = scmp.ge.s32.totalorder %s29, 2
      %s31 = scalar_select %p30, 0, %s29
      %s32 = ssub.s32 %s19, %s31
      %p33 = scmp.eq.s32.totalorder %s32, 0
      %s35 = sadd.s32 %s34, 1
      %s36 = scalar_select %p33, %s34, %s35
      %p39 = pneg %p33
      %p40 = scmp.eq.s32.totalorder %s12, 3
      %p41 = por %p39, %p40
      %p42 = scmp.ne.s32.totalorder %s34, %s37
      %p43 = scmp.eq.s32.totalorder %s12, 0
      %p44 = por %p42, %p43
      %p45 = scmp.ne.s32.totalorder %s34, %s37
      %p46 = scmp.eq.s32.totalorder %s17, 3
      %p47 = por %p45, %p46
      %p48 = scmp.ne.s32.totalorder %s37, %s38
      %p49 = scmp.eq.s32.totalorder %s17, 0
      %p50 = por %p48, %p49
      %p51 = scmp.ne.s32.totalorder %s37, %s38
      %p52 = scmp.eq.s32.totalorder %s18, 3
      %p53 = por %p51, %p52
      %p55 = scmp.ne.s32.totalorder %s38, %s54
      %p56 = scmp.eq.s32.totalorder %s18, 0
      %p57 = por %p55, %p56
      %s59 = sadd.s32 %s58, 1
      %p62 = scmp.eq.s32.totalorder %s12, 3
      %p63 = scmp.ne.s32.totalorder %s58, %s60
      %p64 = scmp.eq.s32.totalorder %s12, 0
      %p65 = por %p63, %p64
      %p66 = scmp.ne.s32.totalorder %s58, %s60
      %p67 = scmp.eq.s32.totalorder %s17, 3
      %p68 = por %p66, %p67
      %p69 = scmp.ne.s32.totalorder %s60, %s61
      %p70 = scmp.eq.s32.totalorder %s17, 0
      %p71 = por %p69, %p70
      %p72 = scmp.ne.s32.totalorder %s60, %s61
      %p73 = scmp.eq.s32.totalorder %s18, 3
      %p74 = por %p72, %p73
      %p76 = scmp.ne.s32.totalorder %s61, %s75
      %p77 = scmp.eq.s32.totalorder %s18, 0
      %p78 = por %p76, %p77
      %s80 = sadd.s32 %s79, 1
      %p83 = scmp.eq.s32.totalorder %s12, 3
      %p84 = scmp.ne.s32.totalorder %s79, %s81
      %p85 = scmp.eq.s32.totalorder %s12, 0
      %p86 = por %p84, %p85
      %p87 = scmp.ne.s32.totalorder %s79, %s81
      %p88 = scmp.eq.s32.totalorder %s17, 3
      %p89 = por %p87, %p88
      %p90 = scmp.ne.s32.totalorder %s81, %s82
      %p91 = scmp.eq.s32.totalorder %s17, 0
      %p92 = por %p90, %p91
      %p93 = scmp.ne.s32.totalorder %s81, %s82
      %p94 = scmp.eq.s32.totalorder %s18, 3
      %p95 = por %p93, %p94
      %p97 = scmp.ne.s32.totalorder %s82, %s96
      %p98 = scmp.eq.s32.totalorder %s18, 0
      %p99 = por %p97, %p98
      %s100 = ssub.s32 %s19, %s31
      %s101 = ssub.s32 %s20, %s27
      %s102 = sor.u32 %s100, %s101
      %p103 = scmp.eq.s32.totalorder %s102, 0
      %s105 = sadd.s32 %s104, 1
      %s106 = scalar_select %p103, %s104, %s105
      %p109 = pneg %p103
      %p110 = scmp.eq.s32.totalorder %s12, 3
      %p111 = por %p109, %p110
      %p112 = scmp.ne.s32.totalorder %s104, %s107
      %p113 = scmp.eq.s32.totalorder %s12, 0
      %p114 = por %p112, %p113
      %p115 = scmp.ne.s32.totalorder %s104, %s107
      %p116 = scmp.eq.s32.totalorder %s17, 3
      %p117 = por %p115, %p116
      %p118 = scmp.ne.s32.totalorder %s107, %s108
      %p119 = scmp.eq.s32.totalorder %s17, 0
      %p120 = por %p118, %p119
      %p121 = scmp.ne.s32.totalorder %s107, %s108
      %p122 = scmp.eq.s32.totalorder %s18, 3
      %p123 = por %p121, %p122
      %p125 = scmp.ne.s32.totalorder %s108, %s124
      %p126 = scmp.eq.s32.totalorder %s18, 0
      %p127 = por %p125, %p126
      %p128 = scmp.le.s32.totalorder 1, %s12
      %p129 = scmp.lt.s32.totalorder %s12, 5
      %p130 = pnand %p128, %p129
      %p131 = pneg %p130
      // Predicated region
      $region9: #{tpu_custom_call.1} parent=5 // pred_check
        _
      $region10: #{tpu_custom_call.1} parent=5 // pred_check_branch
        %133 = sbr.rel (%p130) target = $region12
      $region11: #{tpu_custom_call.1} parent=5 // pred_region
        %s134 = ssub.s32 %s12, 1
        // Predicated region
        $region13: #{tpu_custom_call.1} parent=11 // pred_check
          %p135 = pneg %p71
        $region14: #{tpu_custom_call.1} parent=11 // pred_check_branch
          %137 = sbr.rel (%p135) target = $region16
        $region15: #{tpu_custom_call.1} parent=11 // pred_region
          _
        $region16: #{tpu_custom_call.1} parent=11 // pred_fallthru
          _
        // Predicated region
        $region17: #{tpu_custom_call.1} parent=11 // pred_check
          %p138 = pneg %p92
        $region18: #{tpu_custom_call.1} parent=11 // pred_check_branch
          %140 = sbr.rel (%p138) target = $region20
        $region19: #{tpu_custom_call.1} parent=11 // pred_region
          _
        $region20: #{tpu_custom_call.1} parent=11 // pred_fallthru
          _
      $region12: #{tpu_custom_call.1} parent=5 // pred_fallthru
        _
      %p141 = scmp.lt.s32.totalorder %s12, 4
      // Predicated region
      $region21: #{tpu_custom_call.1} parent=5 // pred_check
        %p142 = pneg %p141
      $region22: #{tpu_custom_call.1} parent=5 // pred_check_branch
        %144 = sbr.rel (%p142) target = $region24
      $region23: #{tpu_custom_call.1} parent=5 // pred_region
        // Predicated region
        $region25: #{tpu_custom_call.1} parent=23 // pred_check
          %p145 = pneg %p44
        $region26: #{tpu_custom_call.1} parent=23 // pred_check_branch
          %147 = sbr.rel (%p145) target = $region28
        $region27: #{tpu_custom_call.1} parent=23 // pred_region
          %p148 = scmp.lt.s32.totalorder %s19, 1
          %s149 = scalar_select %p148, %s19, 1
          %s150 = smul.addr %s149, 60
          %s151 = smul.addr %s150, 4
          %s152 = scalar_lea.vmem %s0, %s151
        $region28: #{tpu_custom_call.1} parent=23 // pred_fallthru
          _
      $region24: #{tpu_custom_call.1} parent=5 // pred_fallthru
        _
      %p153 = scmp.le.s32.totalorder 1, %s12
      %p154 = scmp.lt.s32.totalorder %s12, 5
      %p155 = pnand %p153, %p154
      %p156 = pneg %p155
      // Predicated region
      $region29: #{tpu_custom_call.1} parent=5 // pred_check
        _
      $region30: #{tpu_custom_call.1} parent=5 // pred_check_branch
        %158 = sbr.rel (%p155) target = $region32
      $region31: #{tpu_custom_call.1} parent=5 // pred_region
        %s159 = ssub.s32 %s12, 1
        %p160 = scmp.lt.s32.totalorder %s21, 1
        %s161 = scalar_select %p160, %s21, 1
        %s162 = smul.addr %s161, 60
        %s163 = smul.addr %s162, 4
        %s164 = scalar_lea.vmem %s0, %s163
        %p165 = pneg %p50
        %p166 = pneg %p47
        %p167 = pneg %p71
        %p168 = pneg %p68
        %p169 = pneg %p92
        %p170 = pneg %p89
        %p171 = pneg %p120
        %p172 = pneg %p117
        %s173 = sand.u32 %s107, 1
        %s174 = scalar_lea.sflag [#allocation3], %s173
        %s175 = sand.u32 %s107, 1
        %s176 = smul.addr %s175, 128
        %s177 = scalar_lea.vmem [#allocation2], %s176
        %p178 = scmp.lt.s32.totalorder %s21, 1
        %s179 = scalar_select %p178, %s21, 1
        %s180 = smul.addr %s179, 60
        %s181 = smul.addr %s180, 4
        %s182 = scalar_lea.vmem %s0, %s181
        %s183 = smul.u32 8, %s22
        %s185 = smul.u32 %s22, 8
        %s186 = smul.u32 %s185, 3
        %s187 = smul.addr %s186, 4
        %s188 = scalar_lea.vmem %s182, %s187
        %v189 = vld [vmem:[%s188] sm:$0xf]
        %v190 = vld [vmem:[%s188 + $0x4] sm:$0xf]
        %v191 = vld [vmem:[%s188 + $0xc] sm:$0xf]
        %v192 = vld [vmem:[%s188 + $0x10] sm:$0xf]
        %v193 = vld [vmem:[%s188 + $0x18] sm:$0xf]
        %v194 = vld [vmem:[%s188 + $0x1c] sm:$0xf]
        %v195 = vld [vmem:[%s188 + $0x24] sm:$0xf]
        %v196 = vld [vmem:[%s188 + $0x28] sm:$0xf]
        %v197 = vld [vmem:[%s188 + $0x30] sm:$0xf]
        %v198 = vld [vmem:[%s188 + $0x34] sm:$0xf]
        %v199 = vld [vmem:[%s188 + $0x3c] sm:$0xf]
        %v200 = vld [vmem:[%s188 + $0x40] sm:$0xf]
        %v201 = vld [vmem:[%s188 + $0x48] sm:$0xf]
        %v202 = vld [vmem:[%s188 + $0x4c] sm:$0xf]
        %v203 = vld [vmem:[%s188 + $0x54] sm:$0xf]
        %v204 = vld [vmem:[%s188 + $0x58] sm:$0xf]
        %v205 = vld [vmem:[%s1] sm:$0x3]
        %v206 = vld [vmem:[%s188] sm:$0xe]
        %v207 = vld [vmem:[%s188 + $0x8] sm:$0x1]
        %v208 = vld [vmem:[%s188 + $0xc] sm:$0xe]
        %v209 = vld [vmem:[%s188 + $0x14] sm:$0x1]
        %v210 = vld [vmem:[%s188 + $0x18] sm:$0xe]
        %v211 = vld [vmem:[%s188 + $0x20] sm:$0x1]
        %v212 = vld [vmem:[%s188 + $0x24] sm:$0xe]
        %v213 = vld [vmem:[%s188 + $0x2c] sm:$0x1]
        %v214 = vld [vmem:[%s188 + $0x30] sm:$0xe]
        %v215 = vld [vmem:[%s188 + $0x38] sm:$0x1]
        %v216 = vld [vmem:[%s188 + $0x3c] sm:$0xe]
        %v217 = vld [vmem:[%s188 + $0x44] sm:$0x1]
        %v218 = vld [vmem:[%s188 + $0x48] sm:$0xe]
        %v219 = vld [vmem:[%s188 + $0x50] sm:$0x1]
        %v220 = vld [vmem:[%s188 + $0x54] sm:$0xe]
        %v221 = vld [vmem:[%s188 + $0x5c] sm:$0x1]
        %vm246 = vcmask 1042432
        %vm247 = vcmask 1046532
        %vm248 = vmor %vm246, %vm247
        %v249 = vrot.slane %v206, 5
        %v250 = vrot.slane %v249, 4
        %v251 = vrot.slane %v190, 5
        %v252 = vsel %vm248, %v250, %v251
        %v253 = vrot.slane %v251, 4
        %v254 = vrot.slane %v207, 5
        %v255 = vsel %vm248, %v253, %v254
        %v256 = vrot.slane %v208, 5
        %v257 = vrot.slane %v256, 4
        %v258 = vrot.slane %v192, 5
        %v259 = vsel %vm248, %v257, %v258
        %v260 = vrot.slane %v258, 4
        %v261 = vrot.slane %v209, 5
        %v262 = vsel %vm248, %v260, %v261
        %v263 = vrot.slane %v210, 5
        %v264 = vrot.slane %v263, 4
        %v265 = vrot.slane %v194, 5
        %v266 = vsel %vm248, %v264, %v265
        %v267 = vrot.slane %v265, 4
        %v268 = vrot.slane %v211, 5
        %v269 = vsel %vm248, %v267, %v268
        %v270 = vrot.slane %v212, 5
        %v271 = vrot.slane %v270, 4
        %v272 = vrot.slane %v196, 5
        %v273 = vsel %vm248, %v271, %v272
        %v274 = vrot.slane %v272, 4
        %v275 = vrot.slane %v213, 5
        %v276 = vsel %vm248, %v274, %v275
        %v277 = vrot.slane %v214, 5
        %v278 = vrot.slane %v277, 4
        %v279 = vrot.slane %v198, 5
        %v280 = vsel %vm248, %v278, %v279
        %v281 = vrot.slane %v279, 4
        %v282 = vrot.slane %v215, 5
        %v283 = vsel %vm248, %v281, %v282
        %v284 = vrot.slane %v216, 5
        %v285 = vrot.slane %v284, 4
        %v286 = vrot.slane %v200, 5
        %v287 = vsel %vm248, %v285, %v286
        %v288 = vrot.slane %v286, 4
        %v289 = vrot.slane %v217, 5
        %v290 = vsel %vm248, %v288, %v289
        %v291 = vrot.slane %v218, 5
        %v292 = vrot.slane %v291, 4
        %v293 = vrot.slane %v202, 5
        %v294 = vsel %vm248, %v292, %v293
        %v295 = vrot.slane %v293, 4
        %v296 = vrot.slane %v219, 5
        %v297 = vsel %vm248, %v295, %v296
        %v298 = vrot.slane %v220, 5
        %v299 = vrot.slane %v298, 4
        %v300 = vrot.slane %v204, 5
        %v301 = vsel %vm248, %v299, %v300
        %v302 = vrot.slane %v300, 4
        %v303 = vrot.slane %v221, 5
        %v304 = vsel %vm248, %v302, %v303
        %s305 = scalar_lea.vmem %s1, 2
        %v306 = vld [vmem:[%s305] sm:$0x3]
        %v307 = vunpack.c.l.b16 %v252
        %v308 = vunpack.c.l.b16 %v255
        %v309 = vunpack.c.l.b16 %v259
        %v310 = vunpack.c.l.b16 %v262
        %v311 = vunpack.c.l.b16 %v266
        %v312 = vunpack.c.l.b16 %v269
        %v313 = vunpack.c.l.b16 %v273
        %v314 = vunpack.c.l.b16 %v276
        %v315 = vunpack.c.l.b16 %v280
        %v316 = vunpack.c.l.b16 %v283
        %v317 = vunpack.c.l.b16 %v287
        %v318 = vunpack.c.l.b16 %v290
        %v319 = vunpack.c.l.b16 %v294
        %v320 = vunpack.c.l.b16 %v297
        %v321 = vunpack.c.l.b16 %v301
        %v322 = vunpack.c.l.b16 %v304
        %v323 = vpack.c.b16 %v308, %v307
        %v324 = vpack.c.b16 %v310, %v309
        %v325 = vpack.c.b16 %v312, %v311
        %v326 = vpack.c.b16 %v314, %v313
        %v327 = vpack.c.b16 %v316, %v315
        %v328 = vpack.c.b16 %v318, %v317
        %v329 = vpack.c.b16 %v320, %v319
        %v330 = vpack.c.b16 %v322, %v321
        %vm331 = vcmask 31744
        %v333 = vsel %vm331, %v323, 0
        %v336 = vsel %vm331, %v324, 0
        %v339 = vsel %vm331, %v325, 0
        %v342 = vsel %vm331, %v326, 0
        %v345 = vsel %vm331, %v327, 0
        %v348 = vsel %vm331, %v328, 0
        %v351 = vsel %vm331, %v329, 0
        %v354 = vsel %vm331, %v330, 0
        %vm356 = vcmask 1041408
        %v358 = vsel %vm356, %v306, 0
        %360 = vmatprep.subr.bf16.mxu0 0
        %361 = vmatpush1.bf16.msra.mxu0 %v358
        %362 = vmatprep.subr.bf16.mxu0 0
        %363 = vmatpush1.bf16.msra.mxu0 0
        %364 = vmatprep.subr.bf16.mxu0 0
        %365 = vmatpush1.bf16.msra.mxu0 0
        %366 = vmatprep.subr.bf16.mxu0 0
        %367 = vmatpush1.bf16.msra.mxu0 0
        %368 = vmatprep.subr.bf16.mxu0 0
        %369 = vmatpush1.bf16.msra.mxu0 0
        %370 = vmatprep.subr.bf16.mxu0 0
        %371 = vmatpush1.bf16.msra.mxu0 0
        %372 = vmatprep.subr.bf16.mxu0 0
        %373 = vmatpush1.bf16.msra.mxu0 0
        %374 = vmatprep.subr.bf16.mxu0 0
        %375 = vmatpush1.bf16.msra.mxu0 0
        %376 = vmatprep.subr.bf16.mxu0 0
        %377 = vmatpush1.bf16.msra.mxu0 0
        %378 = vmatprep.subr.bf16.mxu0 0
        %379 = vmatpush1.bf16.msra.mxu0 0
        %380 = vmatprep.subr.bf16.mxu0 0
        %381 = vmatpush1.bf16.msra.mxu0 0
        %382 = vmatprep.subr.bf16.mxu0 0
        %383 = vmatpush1.bf16.msra.mxu0 0
        %384 = vmatprep.subr.bf16.mxu0 0
        %385 = vmatpush1.bf16.msra.mxu0 0
        %386 = vmatprep.subr.bf16.mxu0 0
        %387 = vmatpush1.bf16.msra.mxu0 0
        %388 = vmatprep.subr.bf16.mxu0 0
        %389 = vmatpush1.bf16.msra.mxu0 0
        %390 = vmatprep.subr.bf16.mxu0 0
        %391 = vmatpush1.bf16.msra.mxu0 0
        %392 = vmatprep.mubr.bf16.mxu0 0
        %393 = vmatmul.mubr.bf16.gmra.mrb[0].mxu0 %v333
        %v394 = vpop.f32.mrb[0].mxu0
        %v395 = vadd.f32 0.0, %v394
        %v396 = vpop.f32.mrb[0].mxu0
        %v397 = vpop.f32.mrb[0].mxu0
        %v398 = vadd.f32 0.0, %v397
        %v399 = vpop.f32.mrb[0].mxu0
        %400 = vmatprep.mubr.bf16.mxu0 0
        %401 = vmatmul.mubr.bf16.gmra.mrb[0].mxu0 %v336
        %v402 = vpop.f32.mrb[0].mxu0
        %v403 = vadd.f32 0.0, %v402
        %v404 = vpop.f32.mrb[0].mxu0
        %v405 = vpop.f32.mrb[0].mxu0
        %v406 = vadd.f32 0.0, %v405
        %v407 = vpop.f32.mrb[0].mxu0
        %408 = vmatprep.mubr.bf16.mxu0 0
        %409 = vmatmul.mubr.bf16.gmra.mrb[0].mxu0 %v339
        %v410 = vpop.f32.mrb[0].mxu0
        %v411 = vadd.f32 0.0, %v410
        %v412 = vpop.f32.mrb[0].mxu0
        %v413 = vpop.f32.mrb[0].mxu0
        %v414 = vadd.f32 0.0, %v413
        %v415 = vpop.f32.mrb[0].mxu0
        %416 = vmatprep.mubr.bf16.mxu0 0
        %417 = vmatmul.mubr.bf16.gmra.mrb[0].mxu0 %v342
        %v418 = vpop.f32.mrb[0].mxu0
        %v419 = vadd.f32 0.0, %v418
        %v420 = vpop.f32.mrb[0].mxu0
        %v421 = vpop.f32.mrb[0].mxu0
        %v422 = vadd.f32 0.0, %v421
        %v423 = vpop.f32.mrb[0].mxu0
        %424 = vmatprep.mubr.bf16.mxu0 0
        %425 = vmatmul.mubr.bf16.gmra.mrb[0].mxu0 %v345
        %v426 = vpop.f32.mrb[0].mxu0
        %v427 = vadd.f32 0.0, %v426
        %v428 = vpop.f32.mrb[0].mxu0
        %v429 = vpop.f32.mrb[0].mxu0
        %v430 = vadd.f32 0.0, %v429
        %v431 = vpop.f32.mrb[0].mxu0
        %432 = vmatprep.mubr.bf16.mxu0 0
        %433 = vmatmul.mubr.bf16.gmra.mrb[0].mxu0 %v348
        %v434 = vpop.f32.mrb[0].mxu0
        %v435 = vadd.f32 0.0, %v434
        %v436 = vpop.f32.mrb[0].mxu0
        %v437 = vpop.f32.mrb[0].mxu0
        %v438 = vadd.f32 0.0, %v437
        %v439 = vpop.f32.mrb[0].mxu0
        %440 = vmatprep.mubr.bf16.mxu0 0
        %441 = vmatmul.mubr.bf16.gmra.mrb[0].mxu0 %v351
        %v442 = vpop.f32.mrb[0].mxu0
        %v443 = vadd.f32 0.0, %v442
        %v444 = vpop.f32.mrb[0].mxu0
        %v445 = vpop.f32.mrb[0].mxu0
        %v446 = vadd.f32 0.0, %v445
        %v447 = vpop.f32.mrb[0].mxu0
        %448 = vmatprep.mubr.bf16.mxu0 0
        %449 = vmatmul.mubr.bf16.gmra.mrb[0].mxu0 %v354
        %v450 = vpop.f32.mrb[0].mxu0
        %v451 = vadd.f32 0.0, %v450
        %v452 = vpop.f32.mrb[0].mxu0
        %v453 = vpop.f32.mrb[0].mxu0
        %v454 = vadd.f32 0.0, %v453
        %v455 = vpop.f32.mrb[0].mxu0
        %456 = vdwg.mxu0
        %v465 = vunpack.c.l.b16 %v189
        %v466 = vunpack.c.l.b16 %v190
        %v467 = vunpack.c.l.b16 %v191
        %v468 = vunpack.c.l.b16 %v192
        %v469 = vunpack.c.l.b16 %v193
        %v470 = vunpack.c.l.b16 %v194
        %v471 = vunpack.c.l.b16 %v195
        %v472 = vunpack.c.l.b16 %v196
        %v473 = vunpack.c.l.b16 %v197
        %v474 = vunpack.c.l.b16 %v198
        %v475 = vunpack.c.l.b16 %v199
        %v476 = vunpack.c.l.b16 %v200
        %v477 = vunpack.c.l.b16 %v201
        %v478 = vunpack.c.l.b16 %v202
        %v479 = vunpack.c.l.b16 %v203
        %v480 = vunpack.c.l.b16 %v204
        %v481 = vpack.c.b16 %v466, %v465
        %v482 = vpack.c.b16 %v468, %v467
        %v483 = vpack.c.b16 %v470, %v469
        %v484 = vpack.c.b16 %v472, %v471
        %v485 = vpack.c.b16 %v474, %v473
        %v486 = vpack.c.b16 %v476, %v475
        %v487 = vpack.c.b16 %v478, %v477
        %v488 = vpack.c.b16 %v480, %v479
        %v490 = vsel %vm331, %v481, 0
        %v493 = vsel %vm331, %v482, 0
        %v496 = vsel %vm331, %v483, 0
        %v499 = vsel %vm331, %v484, 0
        %v502 = vsel %vm331, %v485, 0
        %v505 = vsel %vm331, %v486, 0
        %v508 = vsel %vm331, %v487, 0
        %v511 = vsel %vm331, %v488, 0
        %v514 = vsel %vm356, %v205, 0
        %516 = vmatprep.subr.bf16.mxu0 0
        %517 = vmatpush1.bf16.msra.mxu0 %v514
        %518 = vmatprep.subr.bf16.mxu0 0
        %519 = vmatpush1.bf16.msra.mxu0 0
        %520 = vmatprep.subr.bf16.mxu0 0
        %521 = vmatpush1.bf16.msra.mxu0 0
        %522 = vmatprep.subr.bf16.mxu0 0
        %523 = vmatpush1.bf16.msra.mxu0 0
        %524 = vmatprep.subr.bf16.mxu0 0
        %525 = vmatpush1.bf16.msra.mxu0 0
        %526 = vmatprep.subr.bf16.mxu0 0
        %527 = vmatpush1.bf16.msra.mxu0 0
        %528 = vmatprep.subr.bf16.mxu0 0
        %529 = vmatpush1.bf16.msra.mxu0 0
        %530 = vmatprep.subr.bf16.mxu0 0
        %531 = vmatpush1.bf16.msra.mxu0 0
        %532 = vmatprep.subr.bf16.mxu0 0
        %533 = vmatpush1.bf16.msra.mxu0 0
        %534 = vmatprep.subr.bf16.mxu0 0
        %535 = vmatpush1.bf16.msra.mxu0 0
        %536 = vmatprep.subr.bf16.mxu0 0
        %537 = vmatpush1.bf16.msra.mxu0 0
        %538 = vmatprep.subr.bf16.mxu0 0
        %539 = vmatpush1.bf16.msra.mxu0 0
        %540 = vmatprep.subr.bf16.mxu0 0
        %541 = vmatpush1.bf16.msra.mxu0 0
        %542 = vmatprep.subr.bf16.mxu0 0
        %543 = vmatpush1.bf16.msra.mxu0 0
        %544 = vmatprep.subr.bf16.mxu0 0
        %545 = vmatpush1.bf16.msra.mxu0 0
        %546 = vmatprep.subr.bf16.mxu0 0
        %547 = vmatpush1.bf16.msra.mxu0 0
        %548 = vmatprep.mubr.bf16.mxu0 0
        %549 = vmatmul.mubr.bf16.gmra.mrb[0].mxu0 %v490
        %v550 = vpop.f32.mrb[0].mxu0
        %v551 = vadd.f32 %v395, %v550
        %v552 = vpop.f32.mrb[0].mxu0
        %v553 = vpop.f32.mrb[0].mxu0
        %v554 = vadd.f32 %v398, %v553
        %v555 = vpop.f32.mrb[0].mxu0
        %556 = vmatprep.mubr.bf16.mxu0 0
        %557 = vmatmul.mubr.bf16.gmra.mrb[0].mxu0 %v493
        %v558 = vpop.f32.mrb[0].mxu0
        %v559 = vadd.f32 %v403, %v558
        %v560 = vpop.f32.mrb[0].mxu0
        %v561 = vpop.f32.mrb[0].mxu0
        %v562 = vadd.f32 %v406, %v561
        %v563 = vpop.f32.mrb[0].mxu0
        %564 = vmatprep.mubr.bf16.mxu0 0
        %565 = vmatmul.mubr.bf16.gmra.mrb[0].mxu0 %v496
        %v566 = vpop.f32.mrb[0].mxu0
        %v567 = vadd.f32 %v411, %v566
        %v568 = vpop.f32.mrb[0].mxu0
        %v569 = vpop.f32.mrb[0].mxu0
        %v570 = vadd.f32 %v414, %v569
        %v571 = vpop.f32.mrb[0].mxu0
        %572 = vmatprep.mubr.bf16.mxu0 0
        %573 = vmatmul.mubr.bf16.gmra.mrb[0].mxu0 %v499
        %v574 = vpop.f32.mrb[0].mxu0
        %v575 = vadd.f32 %v419, %v574
        %v576 = vpop.f32.mrb[0].mxu0
        %v577 = vpop.f32.mrb[0].mxu0
        %v578 = vadd.f32 %v422, %v577
        %v579 = vpop.f32.mrb[0].mxu0
        %580 = vmatprep.mubr.bf16.mxu0 0
        %581 = vmatmul.mubr.bf16.gmra.mrb[0].mxu0 %v502
        %v582 = vpop.f32.mrb[0].mxu0
        %v583 = vadd.f32 %v427, %v582
        %v584 = vpop.f32.mrb[0].mxu0
        %v585 = vpop.f32.mrb[0].mxu0
        %v586 = vadd.f32 %v430, %v585
        %v587 = vpop.f32.mrb[0].mxu0
        %588 = vmatprep.mubr.bf16.mxu0 0
        %589 = vmatmul.mubr.bf16.gmra.mrb[0].mxu0 %v505
        %v590 = vpop.f32.mrb[0].mxu0
        %v591 = vadd.f32 %v435, %v590
        %v592 = vpop.f32.mrb[0].mxu0
        %v593 = vpop.f32.mrb[0].mxu0
        %v594 = vadd.f32 %v438, %v593
        %v595 = vpop.f32.mrb[0].mxu0
        %596 = vmatprep.mubr.bf16.mxu0 0
        %597 = vmatmul.mubr.bf16.gmra.mrb[0].mxu0 %v508
        %v598 = vpop.f32.mrb[0].mxu0
        %v599 = vadd.f32 %v443, %v598
        %v600 = vpop.f32.mrb[0].mxu0
        %v601 = vpop.f32.mrb[0].mxu0
        %v602 = vadd.f32 %v446, %v601
        %v603 = vpop.f32.mrb[0].mxu0
        %604 = vmatprep.mubr.bf16.mxu0 0
        %605 = vmatmul.mubr.bf16.gmra.mrb[0].mxu0 %v511
        %v606 = vpop.f32.mrb[0].mxu0
        %v607 = vadd.f32 %v451, %v606
        %v608 = vpop.f32.mrb[0].mxu0
        %v609 = vpop.f32.mrb[0].mxu0
        %v610 = vadd.f32 %v454, %v609
        %v611 = vpop.f32.mrb[0].mxu0
        %612 = vdwg.mxu0
        %v613 = vld [vmem:[%s188] sm:$0xc]
        %v614 = vld [vmem:[%s188 + $0x8] sm:$0x3]
        %v615 = vld [vmem:[%s188 + $0xc] sm:$0xc]
        %v616 = vld [vmem:[%s188 + $0x14] sm:$0x3]
        %v617 = vld [vmem:[%s188 + $0x18] sm:$0xc]
        %v618 = vld [vmem:[%s188 + $0x20] sm:$0x3]
        %v619 = vld [vmem:[%s188 + $0x24] sm:$0xc]
        %v620 = vld [vmem:[%s188 + $0x2c] sm:$0x3]
        %v621 = vld [vmem:[%s188 + $0x30] sm:$0xc]
        %v622 = vld [vmem:[%s188 + $0x38] sm:$0x3]
        %v623 = vld [vmem:[%s188 + $0x3c] sm:$0xc]
        %v624 = vld [vmem:[%s188 + $0x44] sm:$0x3]
        %v625 = vld [vmem:[%s188 + $0x48] sm:$0xc]
        %v626 = vld [vmem:[%s188 + $0x50] sm:$0x3]
        %v627 = vld [vmem:[%s188 + $0x54] sm:$0xc]
        %v628 = vld [vmem:[%s188 + $0x5c] sm:$0x3]
        %vm645 = vcmask 1041408
        %vm646 = vcmask 1045508
        %vm647 = vmor %vm645, %vm646
        %v648 = vrot.slane %v613, 6
        %v649 = vrot.slane %v648, 4
        %v650 = vrot.slane %v190, 6
        %v651 = vsel %vm647, %v649, %v650
        %v652 = vrot.slane %v650, 4
        %v653 = vrot.slane %v614, 6
        %v654 = vsel %vm647, %v652, %v653
        %v655 = vrot.slane %v615, 6
        %v656 = vrot.slane %v655, 4
        %v657 = vrot.slane %v192, 6
        %v658 = vsel %vm647, %v656, %v657
        %v659 = vrot.slane %v657, 4
        %v660 = vrot.slane %v616, 6
        %v661 = vsel %vm647, %v659, %v660
        %v662 = vrot.slane %v617, 6
        %v663 = vrot.slane %v662, 4
        %v664 = vrot.slane %v194, 6
        %v665 = vsel %vm647, %v663, %v664
        %v666 = vrot.slane %v664, 4
        %v667 = vrot.slane %v618, 6
        %v668 = vsel %vm647, %v666, %v667
        %v669 = vrot.slane %v619, 6
        %v670 = vrot.slane %v669, 4
        %v671 = vrot.slane %v196, 6
        %v672 = vsel %vm647, %v670, %v671
        %v673 = vrot.slane %v671, 4
        %v674 = vrot.slane %v620, 6
        %v675 = vsel %vm647, %v673, %v674
        %v676 = vrot.slane %v621, 6
        %v677 = vrot.slane %v676, 4
        %v678 = vrot.slane %v198, 6
        %v679 = vsel %vm647, %v677, %v678
        %v680 = vrot.slane %v678, 4
        %v681 = vrot.slane %v622, 6
        %v682 = vsel %vm647, %v680, %v681
        %v683 = vrot.slane %v623, 6
        %v684 = vrot.slane %v683, 4
        %v685 = vrot.slane %v200, 6
        %v686 = vsel %vm647, %v684, %v685
        %v687 = vrot.slane %v685, 4
        %v688 = vrot.slane %v624, 6
        %v689 = vsel %vm647, %v687, %v688
        %v690 = vrot.slane %v625, 6
        %v691 = vrot.slane %v690, 4
        %v692 = vrot.slane %v202, 6
        %v693 = vsel %vm647, %v691, %v692
        %v694 = vrot.slane %v692, 4
        %v695 = vrot.slane %v626, 6
        %v696 = vsel %vm647, %v694, %v695
        %v697 = vrot.slane %v627, 6
        %v698 = vrot.slane %v697, 4
        %v699 = vrot.slane %v204, 6
        %v700 = vsel %vm647, %v698, %v699
        %v701 = vrot.slane %v699, 4
        %v702 = vrot.slane %v628, 6
        %v703 = vsel %vm647, %v701, %v702
        %s704 = scalar_lea.vmem %s1, 4
        %v705 = vld [vmem:[%s704] sm:$0x3]
        %v706 = vunpack.c.l.b16 %v651
        %v707 = vunpack.c.l.b16 %v654
        %v708 = vunpack.c.l.b16 %v658
        %v709 = vunpack.c.l.b16 %v661
        %v710 = vunpack.c.l.b16 %v665
        %v711 = vunpack.c.l.b16 %v668
        %v712 = vunpack.c.l.b16 %v672
        %v713 = vunpack.c.l.b16 %v675
        %v714 = vunpack.c.l.b16 %v679
        %v715 = vunpack.c.l.b16 %v682
        %v716 = vunpack.c.l.b16 %v686
        %v717 = vunpack.c.l.b16 %v689
        %v718 = vunpack.c.l.b16 %v693
        %v719 = vunpack.c.l.b16 %v696
        %v720 = vunpack.c.l.b16 %v700
        %v721 = vunpack.c.l.b16 %v703
        %v722 = vpack.c.b16 %v707, %v706
        %v723 = vpack.c.b16 %v709, %v708
        %v724 = vpack.c.b16 %v711, %v710
        %v725 = vpack.c.b16 %v713, %v712
        %v726 = vpack.c.b16 %v715, %v714
        %v727 = vpack.c.b16 %v717, %v716
        %v728 = vpack.c.b16 %v719, %v718
        %v729 = vpack.c.b16 %v721, %v720
        %v731 = vsel %vm331, %v722, 0
        %v734 = vsel %vm331, %v723, 0
        %v737 = vsel %vm331, %v724, 0
        %v740 = vsel %vm331, %v725, 0
        %v743 = vsel %vm331, %v726, 0
        %v746 = vsel %vm331, %v727, 0
        %v749 = vsel %vm331, %v728, 0
        %v752 = vsel %vm331, %v729, 0
        %v755 = vsel %vm356, %v705, 0
        %757 = vmatprep.subr.bf16.mxu0 0
        %758 = vmatpush1.bf16.msra.mxu0 %v755
        %759 = vmatprep.subr.bf16.mxu0 0
        %760 = vmatpush1.bf16.msra.mxu0 0
        %761 = vmatprep.subr.bf16.mxu0 0
        %762 = vmatpush1.bf16.msra.mxu0 0
        %763 = vmatprep.subr.bf16.mxu0 0
        %764 = vmatpush1.bf16.msra.mxu0 0
        %765 = vmatprep.subr.bf16.mxu0 0
        %766 = vmatpush1.bf16.msra.mxu0 0
        %767 = vmatprep.subr.bf16.mxu0 0
        %768 = vmatpush1.bf16.msra.mxu0 0
        %769 = vmatprep.subr.bf16.mxu0 0
        %770 = vmatpush1.bf16.msra.mxu0 0
        %771 = vmatprep.subr.bf16.mxu0 0
        %772 = vmatpush1.bf16.msra.mxu0 0
        %773 = vmatprep.subr.bf16.mxu0 0
        %774 = vmatpush1.bf16.msra.mxu0 0
        %775 = vmatprep.subr.bf16.mxu0 0
        %776 = vmatpush1.bf16.msra.mxu0 0
        %777 = vmatprep.subr.bf16.mxu0 0
        %778 = vmatpush1.bf16.msra.mxu0 0
        %779 = vmatprep.subr.bf16.mxu0 0
        %780 = vmatpush1.bf16.msra.mxu0 0
        %781 = vmatprep.subr.bf16.mxu0 0
        %782 = vmatpush1.bf16.msra.mxu0 0
        %783 = vmatprep.subr.bf16.mxu0 0
        %784 = vmatpush1.bf16.msra.mxu0 0
        %785 = vmatprep.subr.bf16.mxu0 0
        %786 = vmatpush1.bf16.msra.mxu0 0
        %787 = vmatprep.subr.bf16.mxu0 0
        %788 = vmatpush1.bf16.msra.mxu0 0
        %789 = vmatprep.mubr.bf16.mxu0 0
        %790 = vmatmul.mubr.bf16.gmra.mrb[0].mxu0 %v731
        %v791 = vpop.f32.mrb[0].mxu0
        %v792 = vadd.f32 0.0, %v791
        %v793 = vpop.f32.mrb[0].mxu0
        %v794 = vpop.f32.mrb[0].mxu0
        %v795 = vadd.f32 0.0, %v794
        %v796 = vpop.f32.mrb[0].mxu0
        %797 = vmatprep.mubr.bf16.mxu0 0
        %798 = vmatmul.mubr.bf16.gmra.mrb[0].mxu0 %v734
        %v799 = vpop.f32.mrb[0].mxu0
        %v800 = vadd.f32 0.0, %v799
        %v801 = vpop.f32.mrb[0].mxu0
        %v802 = vpop.f32.mrb[0].mxu0
        %v803 = vadd.f32 0.0, %v802
        %v804 = vpop.f32.mrb[0].mxu0
        %805 = vmatprep.mubr.bf16.mxu0 0
        %806 = vmatmul.mubr.bf16.gmra.mrb[0].mxu0 %v737
        %v807 = vpop.f32.mrb[0].mxu0
        %v808 = vadd.f32 0.0, %v807
        %v809 = vpop.f32.mrb[0].mxu0
        %v810 = vpop.f32.mrb[0].mxu0
        %v811 = vadd.f32 0.0, %v810
        %v812 = vpop.f32.mrb[0].mxu0
        %813 = vmatprep.mubr.bf16.mxu0 0
        %814 = vmatmul.mubr.bf16.gmra.mrb[0].mxu0 %v740
        %v815 = vpop.f32.mrb[0].mxu0
        %v816 = vadd.f32 0.0, %v815
        %v817 = vpop.f32.mrb[0].mxu0
        %v818 = vpop.f32.mrb[0].mxu0
        %v819 = vadd.f32 0.0, %v818
        %v820 = vpop.f32.mrb[0].mxu0
        %821 = vmatprep.mubr.bf16.mxu0 0
        %822 = vmatmul.mubr.bf16.gmra.mrb[0].mxu0 %v743
        %v823 = vpop.f32.mrb[0].mxu0
        %v824 = vadd.f32 0.0, %v823
        %v825 = vpop.f32.mrb[0].mxu0
        %v826 = vpop.f32.mrb[0].mxu0
        %v827 = vadd.f32 0.0, %v826
        %v828 = vpop.f32.mrb[0].mxu0
        %829 = vmatprep.mubr.bf16.mxu0 0
        %830 = vmatmul.mubr.bf16.gmra.mrb[0].mxu0 %v746
        %v831 = vpop.f32.mrb[0].mxu0
        %v832 = vadd.f32 0.0, %v831
        %v833 = vpop.f32.mrb[0].mxu0
        %v834 = vpop.f32.mrb[0].mxu0
        %v835 = vadd.f32 0.0, %v834
        %v836 = vpop.f32.mrb[0].mxu0
        %837 = vmatprep.mubr.bf16.mxu0 0
        %838 = vmatmul.mubr.bf16.gmra.mrb[0].mxu0 %v749
        %v839 = vpop.f32.mrb[0].mxu0
        %v840 = vadd.f32 0.0, %v839
        %v841 = vpop.f32.mrb[0].mxu0
        %v842 = vpop.f32.mrb[0].mxu0
        %v843 = vadd.f32 0.0, %v842
        %v844 = vpop.f32.mrb[0].mxu0
        %845 = vmatprep.mubr.bf16.mxu0 0
        %846 = vmatmul.mubr.bf16.gmra.mrb[0].mxu0 %v752
        %v847 = vpop.f32.mrb[0].mxu0
        %v848 = vadd.f32 0.0, %v847
        %v849 = vpop.f32.mrb[0].mxu0
        %v850 = vpop.f32.mrb[0].mxu0
        %v851 = vadd.f32 0.0, %v850
        %v852 = vpop.f32.mrb[0].mxu0
        %853 = vdwg.mxu0
        %v854 = vadd.f32 %v551, %v792
        %v855 = vadd.f32 %v554, %v795
        %v856 = vadd.f32 %v559, %v800
        %v857 = vadd.f32 %v562, %v803
        %v858 = vadd.f32 %v567, %v808
        %v859 = vadd.f32 %v570, %v811
        %v860 = vadd.f32 %v575, %v816
        %v861 = vadd.f32 %v578, %v819
        %v862 = vadd.f32 %v583, %v824
        %v863 = vadd.f32 %v586, %v827
        %v864 = vadd.f32 %v591, %v832
        %v865 = vadd.f32 %v594, %v835
        %v866 = vadd.f32 %v599, %v840
        %v867 = vadd.f32 %v602, %v843
        %v868 = vadd.f32 %v607, %v848
        %v869 = vadd.f32 %v610, %v851
        %s870 = sadd.s32 %s185, 2
        %s871 = smul.u32 %s870, 3
        %s872 = smul.addr %s871, 4
        %s873 = scalar_lea.vmem %s182, %s872
        %v874 = vld [vmem:[%s873] sm:$0xf]
        %v875 = vld [vmem:[%s873 + $0x4] sm:$0xf]
        %v876 = vld [vmem:[%s873 + $0xc] sm:$0xf]
        %v877 = vld [vmem:[%s873 + $0x10] sm:$0xf]
        %v878 = vld [vmem:[%s873 + $0x18] sm:$0xf]
        %v879 = vld [vmem:[%s873 + $0x1c] sm:$0xf]
        %v880 = vld [vmem:[%s873 + $0x24] sm:$0xf]
        %v881 = vld [vmem:[%s873 + $0x28] sm:$0xf]
        %v882 = vld [vmem:[%s873 + $0x30] sm:$0xf]
        %v883 = vld [vmem:[%s873 + $0x34] sm:$0xf]
        %v884 = vld [vmem:[%s873 + $0x3c] sm:$0xf]
        %v885 = vld [vmem:[%s873 + $0x40] sm:$0xf]
        %v886 = vld [vmem:[%s873 + $0x48] sm:$0xf]
        %v887 = vld [vmem:[%s873 + $0x4c] sm:$0xf]
        %v888 = vld [vmem:[%s873 + $0x54] sm:$0xf]
        %v889 = vld [vmem:[%s873 + $0x58] sm:$0xf]
        %s890 = scalar_lea.vmem %s1, 6
        %v891 = vld [vmem:[%s890] sm:$0x3]
        %v908 = vunpack.c.l.b16 %v874
        %v909 = vunpack.c.l.b16 %v875
        %v910 = vunpack.c.l.b16 %v876
        %v911 = vunpack.c.l.b16 %v877
        %v912 = vunpack.c.l.b16 %v878
        %v913 = vunpack.c.l.b16 %v879
        %v914 = vunpack.c.l.b16 %v880
        %v915 = vunpack.c.l.b16 %v881
        %v916 = vunpack.c.l.b16 %v882
        %v917 = vunpack.c.l.b16 %v883
        %v918 = vunpack.c.l.b16 %v884
        %v919 = vunpack.c.l.b16 %v885
        %v920 = vunpack.c.l.b16 %v886
        %v921 = vunpack.c.l.b16 %v887
        %v922 = vunpack.c.l.b16 %v888
        %v923 = vunpack.c.l.b16 %v889
        %v924 = vpack.c.b16 %v909, %v908
        %v925 = vpack.c.b16 %v911, %v910
        %v926 = vpack.c.b16 %v913, %v912
        %v927 = vpack.c.b16 %v915, %v914
        %v928 = vpack.c.b16 %v917, %v916
        %v929 = vpack.c.b16 %v919, %v918
        %v930 = vpack.c.b16 %v921, %v920
        %v931 = vpack.c.b16 %v923, %v922
        %v933 = vsel %vm331, %v924, 0
        %v936 = vsel %vm331, %v925, 0
        %v939 = vsel %vm331, %v926, 0
        %v942 = vsel %vm331, %v927, 0
        %v945 = vsel %vm331, %v928, 0
        %v948 = vsel %vm331, %v929, 0
        %v951 = vsel %vm331, %v930, 0
        %v954 = vsel %vm331, %v931, 0
        %v957 = vsel %vm356, %v891, 0
        %959 = vmatprep.subr.bf16.mxu0 0
        %960 = vmatpush1.bf16.msra.mxu0 %v957
        %961 = vmatprep.subr.bf16.mxu0 0
        %962 = vmatpush1.bf16.msra.mxu0 0
        %963 = vmatprep.subr.bf16.mxu0 0
        %964 = vmatpush1.bf16.msra.mxu0 0
        %965 = vmatprep.subr.bf16.mxu0 0
        %966 = vmatpush1.bf16.msra.mxu0 0
        %967 = vmatprep.subr.bf16.mxu0 0
        %968 = vmatpush1.bf16.msra.mxu0 0
        %969 = vmatprep.subr.bf16.mxu0 0
        %970 = vmatpush1.bf16.msra.mxu0 0
        %971 = vmatprep.subr.bf16.mxu0 0
        %972 = vmatpush1.bf16.msra.mxu0 0
        %973 = vmatprep.subr.bf16.mxu0 0
        %974 = vmatpush1.bf16.msra.mxu0 0
        %975 = vmatprep.subr.bf16.mxu0 0
        %976 = vmatpush1.bf16.msra.mxu0 0
        %977 = vmatprep.subr.bf16.mxu0 0
        %978 = vmatpush1.bf16.msra.mxu0 0
        %979 = vmatprep.subr.bf16.mxu0 0
        %980 = vmatpush1.bf16.msra.mxu0 0
        %981 = vmatprep.subr.bf16.mxu0 0
        %982 = vmatpush1.bf16.msra.mxu0 0
        %983 = vmatprep.subr.bf16.mxu0 0
        %984 = vmatpush1.bf16.msra.mxu0 0
        %985 = vmatprep.subr.bf16.mxu0 0
        %986 = vmatpush1.bf16.msra.mxu0 0
        %987 = vmatprep.subr.bf16.mxu0 0
        %988 = vmatpush1.bf16.msra.mxu0 0
        %989 = vmatprep.subr.bf16.mxu0 0
        %990 = vmatpush1.bf16.msra.mxu0 0
        %991 = vmatprep.mubr.bf16.mxu0 0
        %992 = vmatmul.mubr.bf16.gmra.mrb[0].mxu0 %v933
        %v993 = vpop.f32.mrb[0].mxu0
        %v994 = vadd.f32 0.0, %v993
        %v995 = vpop.f32.mrb[0].mxu0
        %v996 = vpop.f32.mrb[0].mxu0
        %v997 = vadd.f32 0.0, %v996
        %v998 = vpop.f32.mrb[0].mxu0
        %999 = vmatprep.mubr.bf16.mxu0 0
        %1000 = vmatmul.mubr.bf16.gmra.mrb[0].mxu0 %v936
        %v1001 = vpop.f32.mrb[0].mxu0
        %v1002 = vadd.f32 0.0, %v1001
        %v1003 = vpop.f32.mrb[0].mxu0
        %v1004 = vpop.f32.mrb[0].mxu0
        %v1005 = vadd.f32 0.0, %v1004
        %v1006 = vpop.f32.mrb[0].mxu0
        %1007 = vmatprep.mubr.bf16.mxu0 0
        %1008 = vmatmul.mubr.bf16.gmra.mrb[0].mxu0 %v939
        %v1009 = vpop.f32.mrb[0].mxu0
        %v1010 = vadd.f32 0.0, %v1009
        %v1011 = vpop.f32.mrb[0].mxu0
        %v1012 = vpop.f32.mrb[0].mxu0
        %v1013 = vadd.f32 0.0, %v1012
        %v1014 = vpop.f32.mrb[0].mxu0
        %1015 = vmatprep.mubr.bf16.mxu0 0
        %1016 = vmatmul.mubr.bf16.gmra.mrb[0].mxu0 %v942
        %v1017 = vpop.f32.mrb[0].mxu0
        %v1018 = vadd.f32 0.0, %v1017
        %v1019 = vpop.f32.mrb[0].mxu0
        %v1020 = vpop.f32.mrb[0].mxu0
        %v1021 = vadd.f32 0.0, %v1020
        %v1022 = vpop.f32.mrb[0].mxu0
        %1023 = vmatprep.mubr.bf16.mxu0 0
        %1024 = vmatmul.mubr.bf16.gmra.mrb[0].mxu0 %v945
        %v1025 = vpop.f32.mrb[0].mxu0
        %v1026 = vadd.f32 0.0, %v1025
        %v1027 = vpop.f32.mrb[0].mxu0
        %v1028 = vpop.f32.mrb[0].mxu0
        %v1029 = vadd.f32 0.0, %v1028
        %v1030 = vpop.f32.mrb[0].mxu0
        %1031 = vmatprep.mubr.bf16.mxu0 0
        %1032 = vmatmul.mubr.bf16.gmra.mrb[0].mxu0 %v948
        %v1033 = vpop.f32.mrb[0].mxu0
        %v1034 = vadd.f32 0.0, %v1033
        %v1035 = vpop.f32.mrb[0].mxu0
        %v1036 = vpop.f32.mrb[0].mxu0
        %v1037 = vadd.f32 0.0, %v1036
        %v1038 = vpop.f32.mrb[0].mxu0
        %1039 = vmatprep.mubr.bf16.mxu0 0
        %1040 = vmatmul.mubr.bf16.gmra.mrb[0].mxu0 %v951
        %v1041 = vpop.f32.mrb[0].mxu0
        %v1042 = vadd.f32 0.0, %v1041
        %v1043 = vpop.f32.mrb[0].mxu0
        %v1044 = vpop.f32.mrb[0].mxu0
        %v1045 = vadd.f32 0.0, %v1044
        %v1046 = vpop.f32.mrb[0].mxu0
        %1047 = vmatprep.mubr.bf16.mxu0 0
        %1048 = vmatmul.mubr.bf16.gmra.mrb[0].mxu0 %v954
        %v1049 = vpop.f32.mrb[0].mxu0
        %v1050 = vadd.f32 0.0, %v1049
        %v1051 = vpop.f32.mrb[0].mxu0
        %v1052 = vpop.f32.mrb[0].mxu0
        %v1053 = vadd.f32 0.0, %v1052
        %v1054 = vpop.f32.mrb[0].mxu0
        %1055 = vdwg.mxu0
        %v1056 = vadd.f32 %v854, %v994
        %v1057 = vadd.f32 %v855, %v997
        %v1058 = vadd.f32 %v856, %v1002
        %v1059 = vadd.f32 %v857, %v1005
        %v1060 = vadd.f32 %v858, %v1010
        %v1061 = vadd.f32 %v859, %v1013
        %v1062 = vadd.f32 %v860, %v1018
        %v1063 = vadd.f32 %v861, %v1021
        %v1064 = vadd.f32 %v862, %v1026
        %v1065 = vadd.f32 %v863, %v1029
        %v1066 = vadd.f32 %v864, %v1034
        %v1067 = vadd.f32 %v865, %v1037
        %v1068 = vadd.f32 %v866, %v1042
        %v1069 = vadd.f32 %v867, %v1045
        %v1070 = vadd.f32 %v868, %v1050
        %v1071 = vadd.f32 %v869, %v1053
        %v1072 = vld [vmem:[%s873] sm:$0xe]
        %v1073 = vld [vmem:[%s873 + $0x4] sm:$0xf]
        %v1074 = vld [vmem:[%s873 + $0x8] sm:$0x1]
        %v1075 = vld [vmem:[%s873 + $0xc] sm:$0xe]
        %v1076 = vld [vmem:[%s873 + $0x10] sm:$0xf]
        %v1077 = vld [vmem:[%s873 + $0x14] sm:$0x1]
        %v1078 = vld [vmem:[%s873 + $0x18] sm:$0xe]
        %v1079 = vld [vmem:[%s873 + $0x1c] sm:$0xf]
        %v1080 = vld [vmem:[%s873 + $0x20] sm:$0x1]
        %v1081 = vld [vmem:[%s873 + $0x24] sm:$0xe]
        %v1082 = vld [vmem:[%s873 + $0x28] sm:$0xf]
        %v1083 = vld [vmem:[%s873 + $0x2c] sm:$0x1]
        %v1084 = vld [vmem:[%s873 + $0x30] sm:$0xe]
        %v1085 = vld [vmem:[%s873 + $0x34] sm:$0xf]
        %v1086 = vld [vmem:[%s873 + $0x38] sm:$0x1]
        %v1087 = vld [vmem:[%s873 + $0x3c] sm:$0xe]
        %v1088 = vld [vmem:[%s873 + $0x40] sm:$0xf]
        %v1089 = vld [vmem:[%s873 + $0x44] sm:$0x1]
        %v1090 = vld [vmem:[%s873 + $0x48] sm:$0xe]
        %v1091 = vld [vmem:[%s873 + $0x4c] sm:$0xf]
        %v1092 = vld [vmem:[%s873 + $0x50] sm:$0x1]
        %v1093 = vld [vmem:[%s873 + $0x54] sm:$0xe]
        %v1094 = vld [vmem:[%s873 + $0x58] sm:$0xf]
        %v1095 = vld [vmem:[%s873 + $0x5c] sm:$0x1]
        %v1120 = vrot.slane %v1072, 5
        %v1121 = vrot.slane %v1120, 4
        %v1122 = vrot.slane %v1073, 5
        %v1123 = vsel %vm248, %v1121, %v1122
        %v1124 = vrot.slane %v1122, 4
        %v1125 = vrot.slane %v1074, 5
        %v1126 = vsel %vm248, %v1124, %v1125
        %v1127 = vrot.slane %v1075, 5
        %v1128 = vrot.slane %v1127, 4
        %v1129 = vrot.slane %v1076, 5
        %v1130 = vsel %vm248, %v1128, %v1129
        %v1131 = vrot.slane %v1129, 4
        %v1132 = vrot.slane %v1077, 5
        %v1133 = vsel %vm248, %v1131, %v1132
        %v1134 = vrot.slane %v1078, 5
        %v1135 = vrot.slane %v1134, 4
        %v1136 = vrot.slane %v1079, 5
        %v1137 = vsel %vm248, %v1135, %v1136
        %v1138 = vrot.slane %v1136, 4
        %v1139 = vrot.slane %v1080, 5
        %v1140 = vsel %vm248, %v1138, %v1139
        %v1141 = vrot.slane %v1081, 5
        %v1142 = vrot.slane %v1141, 4
        %v1143 = vrot.slane %v1082, 5
        %v1144 = vsel %vm248, %v1142, %v1143
        %v1145 = vrot.slane %v1143, 4
        %v1146 = vrot.slane %v1083, 5
        %v1147 = vsel %vm248, %v1145, %v1146
        %v1148 = vrot.slane %v1084, 5
        %v1149 = vrot.slane %v1148, 4
        %v1150 = vrot.slane %v1085, 5
        %v1151 = vsel %vm248, %v1149, %v1150
        %v1152 = vrot.slane %v1150, 4
        %v1153 = vrot.slane %v1086, 5
        %v1154 = vsel %vm248, %v1152, %v1153
        %v1155 = vrot.slane %v1087, 5
        %v1156 = vrot.slane %v1155, 4
        %v1157 = vrot.slane %v1088, 5
        %v1158 = vsel %vm248, %v1156, %v1157
        %v1159 = vrot.slane %v1157, 4
        %v1160 = vrot.slane %v1089, 5
        %v1161 = vsel %vm248, %v1159, %v1160
        %v1162 = vrot.slane %v1090, 5
        %v1163 = vrot.slane %v1162, 4
        %v1164 = vrot.slane %v1091, 5
        %v1165 = vsel %vm248, %v1163, %v1164
        %v1166 = vrot.slane %v1164, 4
        %v1167 = vrot.slane %v1092, 5
        %v1168 = vsel %vm248, %v1166, %v1167
        %v1169 = vrot.slane %v1093, 5
        %v1170 = vrot.slane %v1169, 4
        %v1171 = vrot.slane %v1094, 5
        %v1172 = vsel %vm248, %v1170, %v1171
        %v1173 = vrot.slane %v1171, 4
        %v1174 = vrot.slane %v1095, 5
        %v1175 = vsel %vm248, %v1173, %v1174
        %s1176 = scalar_lea.vmem %s1, 8
        %v1177 = vld [vmem:[%s1176] sm:$0x3]
        %v1178 = vunpack.c.l.b16 %v1123
        %v1179 = vunpack.c.l.b16 %v1126
        %v1180 = vunpack.c.l.b16 %v1130
        %v1181 = vunpack.c.l.b16 %v1133
        %v1182 = vunpack.c.l.b16 %v1137
        %v1183 = vunpack.c.l.b16 %v1140
        %v1184 = vunpack.c.l.b16 %v1144
        %v1185 = vunpack.c.l.b16 %v1147
        %v1186 = vunpack.c.l.b16 %v1151
        %v1187 = vunpack.c.l.b16 %v1154
        %v1188 = vunpack.c.l.b16 %v1158
        %v1189 = vunpack.c.l.b16 %v1161
        %v1190 = vunpack.c.l.b16 %v1165
        %v1191 = vunpack.c.l.b16 %v1168
        %v1192 = vunpack.c.l.b16 %v1172
        %v1193 = vunpack.c.l.b16 %v1175
        %v1194 = vpack.c.b16 %v1179, %v1178
        %v1195 = vpack.c.b16 %v1181, %v1180
        %v1196 = vpack.c.b16 %v1183, %v1182
        %v1197 = vpack.c.b16 %v1185, %v1184
        %v1198 = vpack.c.b16 %v1187, %v1186
        %v1199 = vpack.c.b16 %v1189, %v1188
        %v1200 = vpack.c.b16 %v1191, %v1190
        %v1201 = vpack.c.b16 %v1193, %v1192
        %v1203 = vsel %vm331, %v1194, 0
        %v1206 = vsel %vm331, %v1195, 0
        %v1209 = vsel %vm331, %v1196, 0
        %v1212 = vsel %vm331, %v1197, 0
        %v1215 = vsel %vm331, %v1198, 0
        %v1218 = vsel %vm331, %v1199, 0
        %v1221 = vsel %vm331, %v1200, 0
        %v1224 = vsel %vm331, %v1201, 0
        %v1227 = vsel %vm356, %v1177, 0
        %1229 = vmatprep.subr.bf16.mxu0 0
        %1230 = vmatpush1.bf16.msra.mxu0 %v1227
        %1231 = vmatprep.subr.bf16.mxu0 0
        %1232 = vmatpush1.bf16.msra.mxu0 0
        %1233 = vmatprep.subr.bf16.mxu0 0
        %1234 = vmatpush1.bf16.msra.mxu0 0
        %1235 = vmatprep.subr.bf16.mxu0 0
        %1236 = vmatpush1.bf16.msra.mxu0 0
        %1237 = vmatprep.subr.bf16.mxu0 0
        %1238 = vmatpush1.bf16.msra.mxu0 0
        %1239 = vmatprep.subr.bf16.mxu0 0
        %1240 = vmatpush1.bf16.msra.mxu0 0
        %1241 = vmatprep.subr.bf16.mxu0 0
        %1242 = vmatpush1.bf16.msra.mxu0 0
        %1243 = vmatprep.subr.bf16.mxu0 0
        %1244 = vmatpush1.bf16.msra.mxu0 0
        %1245 = vmatprep.subr.bf16.mxu0 0
        %1246 = vmatpush1.bf16.msra.mxu0 0
        %1247 = vmatprep.subr.bf16.mxu0 0
        %1248 = vmatpush1.bf16.msra.mxu0 0
        %1249 = vmatprep.subr.bf16.mxu0 0
        %1250 = vmatpush1.bf16.msra.mxu0 0
        %1251 = vmatprep.subr.bf16.mxu0 0
        %1252 = vmatpush1.bf16.msra.mxu0 0
        %1253 = vmatprep.subr.bf16.mxu0 0
        %1254 = vmatpush1.bf16.msra.mxu0 0
        %1255 = vmatprep.subr.bf16.mxu0 0
        %1256 = vmatpush1.bf16.msra.mxu0 0
        %1257 = vmatprep.subr.bf16.mxu0 0
        %1258 = vmatpush1.bf16.msra.mxu0 0
        %1259 = vmatprep.subr.bf16.mxu0 0
        %1260 = vmatpush1.bf16.msra.mxu0 0
        %1261 = vmatprep.mubr.bf16.mxu0 0
        %1262 = vmatmul.mubr.bf16.gmra.mrb[0].mxu0 %v1203
        %v1263 = vpop.f32.mrb[0].mxu0
        %v1264 = vadd.f32 0.0, %v1263
        %v1265 = vpop.f32.mrb[0].mxu0
        %v1266 = vpop.f32.mrb[0].mxu0
        %v1267 = vadd.f32 0.0, %v1266
        %v1268 = vpop.f32.mrb[0].mxu0
        %1269 = vmatprep.mubr.bf16.mxu0 0
        %1270 = vmatmul.mubr.bf16.gmra.mrb[0].mxu0 %v1206
        %v1271 = vpop.f32.mrb[0].mxu0
        %v1272 = vadd.f32 0.0, %v1271
        %v1273 = vpop.f32.mrb[0].mxu0
        %v1274 = vpop.f32.mrb[0].mxu0
        %v1275 = vadd.f32 0.0, %v1274
        %v1276 = vpop.f32.mrb[0].mxu0
        %1277 = vmatprep.mubr.bf16.mxu0 0
        %1278 = vmatmul.mubr.bf16.gmra.mrb[0].mxu0 %v1209
        %v1279 = vpop.f32.mrb[0].mxu0
        %v1280 = vadd.f32 0.0, %v1279
        %v1281 = vpop.f32.mrb[0].mxu0
        %v1282 = vpop.f32.mrb[0].mxu0
        %v1283 = vadd.f32 0.0, %v1282
        %v1284 = vpop.f32.mrb[0].mxu0
        %1285 = vmatprep.mubr.bf16.mxu0 0
        %1286 = vmatmul.mubr.bf16.gmra.mrb[0].mxu0 %v1212
        %v1287 = vpop.f32.mrb[0].mxu0
        %v1288 = vadd.f32 0.0, %v1287
        %v1289 = vpop.f32.mrb[0].mxu0
        %v1290 = vpop.f32.mrb[0].mxu0
        %v1291 = vadd.f32 0.0, %v1290
        %v1292 = vpop.f32.mrb[0].mxu0
        %1293 = vmatprep.mubr.bf16.mxu0 0
        %1294 = vmatmul.mubr.bf16.gmra.mrb[0].mxu0 %v1215
        %v1295 = vpop.f32.mrb[0].mxu0
        %v1296 = vadd.f32 0.0, %v1295
        %v1297 = vpop.f32.mrb[0].mxu0
        %v1298 = vpop.f32.mrb[0].mxu0
        %v1299 = vadd.f32 0.0, %v1298
        %v1300 = vpop.f32.mrb[0].mxu0
        %1301 = vmatprep.mubr.bf16.mxu0 0
        %1302 = vmatmul.mubr.bf16.gmra.mrb[0].mxu0 %v1218
        %v1303 = vpop.f32.mrb[0].mxu0
        %v1304 = vadd.f32 0.0, %v1303
        %v1305 = vpop.f32.mrb[0].mxu0
        %v1306 = vpop.f32.mrb[0].mxu0
        %v1307 = vadd.f32 0.0, %v1306
        %v1308 = vpop.f32.mrb[0].mxu0
        %1309 = vmatprep.mubr.bf16.mxu0 0
        %1310 = vmatmul.mubr.bf16.gmra.mrb[0].mxu0 %v1221
        %v1311 = vpop.f32.mrb[0].mxu0
        %v1312 = vadd.f32 0.0, %v1311
        %v1313 = vpop.f32.mrb[0].mxu0
        %v1314 = vpop.f32.mrb[0].mxu0
        %v1315 = vadd.f32 0.0, %v1314
        %v1316 = vpop.f32.mrb[0].mxu0
        %1317 = vmatprep.mubr.bf16.mxu0 0
        %1318 = vmatmul.mubr.bf16.gmra.mrb[0].mxu0 %v1224
        %v1319 = vpop.f32.mrb[0].mxu0
        %v1320 = vadd.f32 0.0, %v1319
        %v1321 = vpop.f32.mrb[0].mxu0
        %v1322 = vpop.f32.mrb[0].mxu0
        %v1323 = vadd.f32 0.0, %v1322
        %v1324 = vpop.f32.mrb[0].mxu0
        %1325 = vdwg.mxu0
        %v1326 = vadd.f32 %v1056, %v1264
        %v1327 = vadd.f32 %v1057, %v1267
        %v1328 = vadd.f32 %v1058, %v1272
        %v1329 = vadd.f32 %v1059, %v1275
        %v1330 = vadd.f32 %v1060, %v1280
        %v1331 = vadd.f32 %v1061, %v1283
        %v1332 = vadd.f32 %v1062, %v1288
        %v1333 = vadd.f32 %v1063, %v1291
        %v1334 = vadd.f32 %v1064, %v1296
        %v1335 = vadd.f32 %v1065, %v1299
        %v1336 = vadd.f32 %v1066, %v1304
        %v1337 = vadd.f32 %v1067, %v1307
        %v1338 = vadd.f32 %v1068, %v1312
        %v1339 = vadd.f32 %v1069, %v1315
        %v1340 = vadd.f32 %v1070, %v1320
        %v1341 = vadd.f32 %v1071, %v1323
        %v1342 = vld [vmem:[%s873] sm:$0xc]
        %v1343 = vld [vmem:[%s873 + $0x8] sm:$0x3]
        %v1344 = vld [vmem:[%s873 + $0xc] sm:$0xc]
        %v1345 = vld [vmem:[%s873 + $0x14] sm:$0x3]
        %v1346 = vld [vmem:[%s873 + $0x18] sm:$0xc]
        %v1347 = vld [vmem:[%s873 + $0x20] sm:$0x3]
        %v1348 = vld [vmem:[%s873 + $0x24] sm:$0xc]
        %v1349 = vld [vmem:[%s873 + $0x2c] sm:$0x3]
        %v1350 = vld [vmem:[%s873 + $0x30] sm:$0xc]
        %v1351 = vld [vmem:[%s873 + $0x38] sm:$0x3]
        %v1352 = vld [vmem:[%s873 + $0x3c] sm:$0xc]
        %v1353 = vld [vmem:[%s873 + $0x44] sm:$0x3]
        %v1354 = vld [vmem:[%s873 + $0x48] sm:$0xc]
        %v1355 = vld [vmem:[%s873 + $0x50] sm:$0x3]
        %v1356 = vld [vmem:[%s873 + $0x54] sm:$0xc]
        %v1357 = vld [vmem:[%s873 + $0x5c] sm:$0x3]
        %v1374 = vrot.slane %v1342, 6
        %v1375 = vrot.slane %v1374, 4
        %v1376 = vrot.slane %v1073, 6
        %v1377 = vsel %vm647, %v1375, %v1376
        %v1378 = vrot.slane %v1376, 4
        %v1379 = vrot.slane %v1343, 6
        %v1380 = vsel %vm647, %v1378, %v1379
        %v1381 = vrot.slane %v1344, 6
        %v1382 = vrot.slane %v1381, 4
        %v1383 = vrot.slane %v1076, 6
        %v1384 = vsel %vm647, %v1382, %v1383
        %v1385 = vrot.slane %v1383, 4
        %v1386 = vrot.slane %v1345, 6
        %v1387 = vsel %vm647, %v1385, %v1386
        %v1388 = vrot.slane %v1346, 6
        %v1389 = vrot.slane %v1388, 4
        %v1390 = vrot.slane %v1079, 6
        %v1391 = vsel %vm647, %v1389, %v1390
        %v1392 = vrot.slane %v1390, 4
        %v1393 = vrot.slane %v1347, 6
        %v1394 = vsel %vm647, %v1392, %v1393
        %v1395 = vrot.slane %v1348, 6
        %v1396 = vrot.slane %v1395, 4
        %v1397 = vrot.slane %v1082, 6
        %v1398 = vsel %vm647, %v1396, %v1397
        %v1399 = vrot.slane %v1397, 4
        %v1400 = vrot.slane %v1349, 6
        %v1401 = vsel %vm647, %v1399, %v1400
        %v1402 = vrot.slane %v1350, 6
        %v1403 = vrot.slane %v1402, 4
        %v1404 = vrot.slane %v1085, 6
        %v1405 = vsel %vm647, %v1403, %v1404
        %v1406 = vrot.slane %v1404, 4
        %v1407 = vrot.slane %v1351, 6
        %v1408 = vsel %vm647, %v1406, %v1407
        %v1409 = vrot.slane %v1352, 6
        %v1410 = vrot.slane %v1409, 4
        %v1411 = vrot.slane %v1088, 6
        %v1412 = vsel %vm647, %v1410, %v1411
        %v1413 = vrot.slane %v1411, 4
        %v1414 = vrot.slane %v1353, 6
        %v1415 = vsel %vm647, %v1413, %v1414
        %v1416 = vrot.slane %v1354, 6
        %v1417 = vrot.slane %v1416, 4
        %v1418 = vrot.slane %v1091, 6
        %v1419 = vsel %vm647, %v1417, %v1418
        %v1420 = vrot.slane %v1418, 4
        %v1421 = vrot.slane %v1355, 6
        %v1422 = vsel %vm647, %v1420, %v1421
        %v1423 = vrot.slane %v1356, 6
        %v1424 = vrot.slane %v1423, 4
        %v1425 = vrot.slane %v1094, 6
        %v1426 = vsel %vm647, %v1424, %v1425
        %v1427 = vrot.slane %v1425, 4
        %v1428 = vrot.slane %v1357, 6
        %v1429 = vsel %vm647, %v1427, %v1428
        %s1430 = scalar_lea.vmem %s1, 10
        %v1431 = vld [vmem:[%s1430] sm:$0x3]
        %v1432 = vunpack.c.l.b16 %v1377
        %v1433 = vunpack.c.l.b16 %v1380
        %v1434 = vunpack.c.l.b16 %v1384
        %v1435 = vunpack.c.l.b16 %v1387
        %v1436 = vunpack.c.l.b16 %v1391
        %v1437 = vunpack.c.l.b16 %v1394
        %v1438 = vunpack.c.l.b16 %v1398
        %v1439 = vunpack.c.l.b16 %v1401
        %v1440 = vunpack.c.l.b16 %v1405
        %v1441 = vunpack.c.l.b16 %v1408
        %v1442 = vunpack.c.l.b16 %v1412
        %v1443 = vunpack.c.l.b16 %v1415
        %v1444 = vunpack.c.l.b16 %v1419
        %v1445 = vunpack.c.l.b16 %v1422
        %v1446 = vunpack.c.l.b16 %v1426
        %v1447 = vunpack.c.l.b16 %v1429
        %v1448 = vpack.c.b16 %v1433, %v1432
        %v1449 = vpack.c.b16 %v1435, %v1434
        %v1450 = vpack.c.b16 %v1437, %v1436
        %v1451 = vpack.c.b16 %v1439, %v1438
        %v1452 = vpack.c.b16 %v1441, %v1440
        %v1453 = vpack.c.b16 %v1443, %v1442
        %v1454 = vpack.c.b16 %v1445, %v1444
        %v1455 = vpack.c.b16 %v1447, %v1446
        %v1457 = vsel %vm331, %v1448, 0
        %v1460 = vsel %vm331, %v1449, 0
        %v1463 = vsel %vm331, %v1450, 0
        %v1466 = vsel %vm331, %v1451, 0
        %v1469 = vsel %vm331, %v1452, 0
        %v1472 = vsel %vm331, %v1453, 0
        %v1475 = vsel %vm331, %v1454, 0
        %v1478 = vsel %vm331, %v1455, 0
        %v1481 = vsel %vm356, %v1431, 0
        %1483 = vmatprep.subr.bf16.mxu0 0
        %1484 = vmatpush1.bf16.msra.mxu0 %v1481
        %1485 = vmatprep.subr.bf16.mxu0 0
        %1486 = vmatpush1.bf16.msra.mxu0 0
        %1487 = vmatprep.subr.bf16.mxu0 0
        %1488 = vmatpush1.bf16.msra.mxu0 0
        %1489 = vmatprep.subr.bf16.mxu0 0
        %1490 = vmatpush1.bf16.msra.mxu0 0
        %1491 = vmatprep.subr.bf16.mxu0 0
        %1492 = vmatpush1.bf16.msra.mxu0 0
        %1493 = vmatprep.subr.bf16.mxu0 0
        %1494 = vmatpush1.bf16.msra.mxu0 0
        %1495 = vmatprep.subr.bf16.mxu0 0
        %1496 = vmatpush1.bf16.msra.mxu0 0
        %1497 = vmatprep.subr.bf16.mxu0 0
        %1498 = vmatpush1.bf16.msra.mxu0 0
        %1499 = vmatprep.subr.bf16.mxu0 0
        %1500 = vmatpush1.bf16.msra.mxu0 0
        %1501 = vmatprep.subr.bf16.mxu0 0
        %1502 = vmatpush1.bf16.msra.mxu0 0
        %1503 = vmatprep.subr.bf16.mxu0 0
        %1504 = vmatpush1.bf16.msra.mxu0 0
        %1505 = vmatprep.subr.bf16.mxu0 0
        %1506 = vmatpush1.bf16.msra.mxu0 0
        %1507 = vmatprep.subr.bf16.mxu0 0
        %1508 = vmatpush1.bf16.msra.mxu0 0
        %1509 = vmatprep.subr.bf16.mxu0 0
        %1510 = vmatpush1.bf16.msra.mxu0 0
        %1511 = vmatprep.subr.bf16.mxu0 0
        %1512 = vmatpush1.bf16.msra.mxu0 0
        %1513 = vmatprep.subr.bf16.mxu0 0
        %1514 = vmatpush1.bf16.msra.mxu0 0
        %1515 = vmatprep.mubr.bf16.mxu0 0
        %1516 = vmatmul.mubr.bf16.gmra.mrb[0].mxu0 %v1457
        %v1517 = vpop.f32.mrb[0].mxu0
        %v1518 = vadd.f32 0.0, %v1517
        %v1519 = vpop.f32.mrb[0].mxu0
        %v1520 = vpop.f32.mrb[0].mxu0
        %v1521 = vadd.f32 0.0, %v1520
        %v1522 = vpop.f32.mrb[0].mxu0
        %1523 = vmatprep.mubr.bf16.mxu0 0
        %1524 = vmatmul.mubr.bf16.gmra.mrb[0].mxu0 %v1460
        %v1525 = vpop.f32.mrb[0].mxu0
        %v1526 = vadd.f32 0.0, %v1525
        %v1527 = vpop.f32.mrb[0].mxu0
        %v1528 = vpop.f32.mrb[0].mxu0
        %v1529 = vadd.f32 0.0, %v1528
        %v1530 = vpop.f32.mrb[0].mxu0
        %1531 = vmatprep.mubr.bf16.mxu0 0
        %1532 = vmatmul.mubr.bf16.gmra.mrb[0].mxu0 %v1463
        %v1533 = vpop.f32.mrb[0].mxu0
        %v1534 = vadd.f32 0.0, %v1533
        %v1535 = vpop.f32.mrb[0].mxu0
        %v1536 = vpop.f32.mrb[0].mxu0
        %v1537 = vadd.f32 0.0, %v1536
        %v1538 = vpop.f32.mrb[0].mxu0
        %1539 = vmatprep.mubr.bf16.mxu0 0
        %1540 = vmatmul.mubr.bf16.gmra.mrb[0].mxu0 %v1466
        %v1541 = vpop.f32.mrb[0].mxu0
        %v1542 = vadd.f32 0.0, %v1541
        %v1543 = vpop.f32.mrb[0].mxu0
        %v1544 = vpop.f32.mrb[0].mxu0
        %v1545 = vadd.f32 0.0, %v1544
        %v1546 = vpop.f32.mrb[0].mxu0
        %1547 = vmatprep.mubr.bf16.mxu0 0
        %1548 = vmatmul.mubr.bf16.gmra.mrb[0].mxu0 %v1469
        %v1549 = vpop.f32.mrb[0].mxu0
        %v1550 = vadd.f32 0.0, %v1549
        %v1551 = vpop.f32.mrb[0].mxu0
        %v1552 = vpop.f32.mrb[0].mxu0
        %v1553 = vadd.f32 0.0, %v1552
        %v1554 = vpop.f32.mrb[0].mxu0
        %1555 = vmatprep.mubr.bf16.mxu0 0
        %1556 = vmatmul.mubr.bf16.gmra.mrb[0].mxu0 %v1472
        %v1557 = vpop.f32.mrb[0].mxu0
        %v1558 = vadd.f32 0.0, %v1557
        %v1559 = vpop.f32.mrb[0].mxu0
        %v1560 = vpop.f32.mrb[0].mxu0
        %v1561 = vadd.f32 0.0, %v1560
        %v1562 = vpop.f32.mrb[0].mxu0
        %1563 = vmatprep.mubr.bf16.mxu0 0
        %1564 = vmatmul.mubr.bf16.gmra.mrb[0].mxu0 %v1475
        %v1565 = vpop.f32.mrb[0].mxu0
        %v1566 = vadd.f32 0.0, %v1565
        %v1567 = vpop.f32.mrb[0].mxu0
        %v1568 = vpop.f32.mrb[0].mxu0
        %v1569 = vadd.f32 0.0, %v1568
        %v1570 = vpop.f32.mrb[0].mxu0
        %1571 = vmatprep.mubr.bf16.mxu0 0
        %1572 = vmatmul.mubr.bf16.gmra.mrb[0].mxu0 %v1478
        %v1573 = vpop.f32.mrb[0].mxu0
        %v1574 = vadd.f32 0.0, %v1573
        %v1575 = vpop.f32.mrb[0].mxu0
        %v1576 = vpop.f32.mrb[0].mxu0
        %v1577 = vadd.f32 0.0, %v1576
        %v1578 = vpop.f32.mrb[0].mxu0
        %1579 = vdwg.mxu0
        %v1580 = vadd.f32 %v1326, %v1518
        %v1581 = vadd.f32 %v1327, %v1521
        %v1582 = vadd.f32 %v1328, %v1526
        %v1583 = vadd.f32 %v1329, %v1529
        %v1584 = vadd.f32 %v1330, %v1534
        %v1585 = vadd.f32 %v1331, %v1537
        %v1586 = vadd.f32 %v1332, %v1542
        %v1587 = vadd.f32 %v1333, %v1545
        %v1588 = vadd.f32 %v1334, %v1550
        %v1589 = vadd.f32 %v1335, %v1553
        %v1590 = vadd.f32 %v1336, %v1558
        %v1591 = vadd.f32 %v1337, %v1561
        %v1592 = vadd.f32 %v1338, %v1566
        %v1593 = vadd.f32 %v1339, %v1569
        %v1594 = vadd.f32 %v1340, %v1574
        %v1595 = vadd.f32 %v1341, %v1577
        %s1596 = sadd.s32 %s185, 4
        %s1597 = smul.u32 %s1596, 3
        %s1598 = smul.addr %s1597, 4
        %s1599 = scalar_lea.vmem %s182, %s1598
        %v1600 = vld [vmem:[%s1599] sm:$0xf]
        %v1601 = vld [vmem:[%s1599 + $0x4] sm:$0xf]
        %v1602 = vld [vmem:[%s1599 + $0xc] sm:$0xf]
        %v1603 = vld [vmem:[%s1599 + $0x10] sm:$0xf]
        %v1604 = vld [vmem:[%s1599 + $0x18] sm:$0xf]
        %v1605 = vld [vmem:[%s1599 + $0x1c] sm:$0xf]
        %v1606 = vld [vmem:[%s1599 + $0x24] sm:$0xf]
        %v1607 = vld [vmem:[%s1599 + $0x28] sm:$0xf]
        %v1608 = vld [vmem:[%s1599 + $0x30] sm:$0xf]
        %v1609 = vld [vmem:[%s1599 + $0x34] sm:$0xf]
        %v1610 = vld [vmem:[%s1599 + $0x3c] sm:$0xf]
        %v1611 = vld [vmem:[%s1599 + $0x40] sm:$0xf]
        %v1612 = vld [vmem:[%s1599 + $0x48] sm:$0xf]
        %v1613 = vld [vmem:[%s1599 + $0x4c] sm:$0xf]
        %v1614 = vld [vmem:[%s1599 + $0x54] sm:$0xf]
        %v1615 = vld [vmem:[%s1599 + $0x58] sm:$0xf]
        %s1616 = scalar_lea.vmem %s1, 12
        %v1617 = vld [vmem:[%s1616] sm:$0x3]
        %v1634 = vunpack.c.l.b16 %v1600
        %v1635 = vunpack.c.l.b16 %v1601
        %v1636 = vunpack.c.l.b16 %v1602
        %v1637 = vunpack.c.l.b16 %v1603
        %v1638 = vunpack.c.l.b16 %v1604
        %v1639 = vunpack.c.l.b16 %v1605
        %v1640 = vunpack.c.l.b16 %v1606
        %v1641 = vunpack.c.l.b16 %v1607
        %v1642 = vunpack.c.l.b16 %v1608
        %v1643 = vunpack.c.l.b16 %v1609
        %v1644 = vunpack.c.l.b16 %v1610
        %v1645 = vunpack.c.l.b16 %v1611
        %v1646 = vunpack.c.l.b16 %v1612
        %v1647 = vunpack.c.l.b16 %v1613
        %v1648 = vunpack.c.l.b16 %v1614
        %v1649 = vunpack.c.l.b16 %v1615
        %v1650 = vpack.c.b16 %v1635, %v1634
        %v1651 = vpack.c.b16 %v1637, %v1636
        %v1652 = vpack.c.b16 %v1639, %v1638
        %v1653 = vpack.c.b16 %v1641, %v1640
        %v1654 = vpack.c.b16 %v1643, %v1642
        %v1655 = vpack.c.b16 %v1645, %v1644
        %v1656 = vpack.c.b16 %v1647, %v1646
        %v1657 = vpack.c.b16 %v1649, %v1648
        %v1659 = vsel %vm331, %v1650, 0
        %v1662 = vsel %vm331, %v1651, 0
        %v1665 = vsel %vm331, %v1652, 0
        %v1668 = vsel %vm331, %v1653, 0
        %v1671 = vsel %vm331, %v1654, 0
        %v1674 = vsel %vm331, %v1655, 0
        %v1677 = vsel %vm331, %v1656, 0
        %v1680 = vsel %vm331, %v1657, 0
        %v1683 = vsel %vm356, %v1617, 0
        %1685 = vmatprep.subr.bf16.mxu0 0
        %1686 = vmatpush1.bf16.msra.mxu0 %v1683
        %1687 = vmatprep.subr.bf16.mxu0 0
        %1688 = vmatpush1.bf16.msra.mxu0 0
        %1689 = vmatprep.subr.bf16.mxu0 0
        %1690 = vmatpush1.bf16.msra.mxu0 0
        %1691 = vmatprep.subr.bf16.mxu0 0
        %1692 = vmatpush1.bf16.msra.mxu0 0
        %1693 = vmatprep.subr.bf16.mxu0 0
        %1694 = vmatpush1.bf16.msra.mxu0 0
        %1695 = vmatprep.subr.bf16.mxu0 0
        %1696 = vmatpush1.bf16.msra.mxu0 0
        %1697 = vmatprep.subr.bf16.mxu0 0
        %1698 = vmatpush1.bf16.msra.mxu0 0
        %1699 = vmatprep.subr.bf16.mxu0 0
        %1700 = vmatpush1.bf16.msra.mxu0 0
        %1701 = vmatprep.subr.bf16.mxu0 0
        %1702 = vmatpush1.bf16.msra.mxu0 0
        %1703 = vmatprep.subr.bf16.mxu0 0
        %1704 = vmatpush1.bf16.msra.mxu0 0
        %1705 = vmatprep.subr.bf16.mxu0 0
        %1706 = vmatpush1.bf16.msra.mxu0 0
        %1707 = vmatprep.subr.bf16.mxu0 0
        %1708 = vmatpush1.bf16.msra.mxu0 0
        %1709 = vmatprep.subr.bf16.mxu0 0
        %1710 = vmatpush1.bf16.msra.mxu0 0
        %1711 = vmatprep.subr.bf16.mxu0 0
        %1712 = vmatpush1.bf16.msra.mxu0 0
        %1713 = vmatprep.subr.bf16.mxu0 0
        %1714 = vmatpush1.bf16.msra.mxu0 0
        %1715 = vmatprep.subr.bf16.mxu0 0
        %1716 = vmatpush1.bf16.msra.mxu0 0
        %1717 = vmatprep.mubr.bf16.mxu0 0
        %1718 = vmatmul.mubr.bf16.gmra.mrb[0].mxu0 %v1659
        %v1719 = vpop.f32.mrb[0].mxu0
        %v1720 = vadd.f32 0.0, %v1719
        %v1721 = vpop.f32.mrb[0].mxu0
        %v1722 = vpop.f32.mrb[0].mxu0
        %v1723 = vadd.f32 0.0, %v1722
        %v1724 = vpop.f32.mrb[0].mxu0
        %1725 = vmatprep.mubr.bf16.mxu0 0
        %1726 = vmatmul.mubr.bf16.gmra.mrb[0].mxu0 %v1662
        %v1727 = vpop.f32.mrb[0].mxu0
        %v1728 = vadd.f32 0.0, %v1727
        %v1729 = vpop.f32.mrb[0].mxu0
        %v1730 = vpop.f32.mrb[0].mxu0
        %v1731 = vadd.f32 0.0, %v1730
        %v1732 = vpop.f32.mrb[0].mxu0
        %1733 = vmatprep.mubr.bf16.mxu0 0
        %1734 = vmatmul.mubr.bf16.gmra.mrb[0].mxu0 %v1665
        %v1735 = vpop.f32.mrb[0].mxu0
        %v1736 = vadd.f32 0.0, %v1735
        %v1737 = vpop.f32.mrb[0].mxu0
        %v1738 = vpop.f32.mrb[0].mxu0
        %v1739 = vadd.f32 0.0, %v1738
        %v1740 = vpop.f32.mrb[0].mxu0
        %1741 = vmatprep.mubr.bf16.mxu0 0
        %1742 = vmatmul.mubr.bf16.gmra.mrb[0].mxu0 %v1668
        %v1743 = vpop.f32.mrb[0].mxu0
        %v1744 = vadd.f32 0.0, %v1743
        %v1745 = vpop.f32.mrb[0].mxu0
        %v1746 = vpop.f32.mrb[0].mxu0
        %v1747 = vadd.f32 0.0, %v1746
        %v1748 = vpop.f32.mrb[0].mxu0
        %1749 = vmatprep.mubr.bf16.mxu0 0
        %1750 = vmatmul.mubr.bf16.gmra.mrb[0].mxu0 %v1671
        %v1751 = vpop.f32.mrb[0].mxu0
        %v1752 = vadd.f32 0.0, %v1751
        %v1753 = vpop.f32.mrb[0].mxu0
        %v1754 = vpop.f32.mrb[0].mxu0
        %v1755 = vadd.f32 0.0, %v1754
        %v1756 = vpop.f32.mrb[0].mxu0
        %1757 = vmatprep.mubr.bf16.mxu0 0
        %1758 = vmatmul.mubr.bf16.gmra.mrb[0].mxu0 %v1674
        %v1759 = vpop.f32.mrb[0].mxu0
        %v1760 = vadd.f32 0.0, %v1759
        %v1761 = vpop.f32.mrb[0].mxu0
        %v1762 = vpop.f32.mrb[0].mxu0
        %v1763 = vadd.f32 0.0, %v1762
        %v1764 = vpop.f32.mrb[0].mxu0
        %1765 = vmatprep.mubr.bf16.mxu0 0
        %1766 = vmatmul.mubr.bf16.gmra.mrb[0].mxu0 %v1677
        %v1767 = vpop.f32.mrb[0].mxu0
        %v1768 = vadd.f32 0.0, %v1767
        %v1769 = vpop.f32.mrb[0].mxu0
        %v1770 = vpop.f32.mrb[0].mxu0
        %v1771 = vadd.f32 0.0, %v1770
        %v1772 = vpop.f32.mrb[0].mxu0
        %1773 = vmatprep.mubr.bf16.mxu0 0
        %1774 = vmatmul.mubr.bf16.gmra.mrb[0].mxu0 %v1680
        %v1775 = vpop.f32.mrb[0].mxu0
        %v1776 = vadd.f32 0.0, %v1775
        %v1777 = vpop.f32.mrb[0].mxu0
        %v1778 = vpop.f32.mrb[0].mxu0
        %v1779 = vadd.f32 0.0, %v1778
        %v1780 = vpop.f32.mrb[0].mxu0
        %1781 = vdwg.mxu0
        %v1782 = vadd.f32 %v1580, %v1720
        %v1783 = vadd.f32 %v1581, %v1723
        %v1784 = vadd.f32 %v1582, %v1728
        %v1785 = vadd.f32 %v1583, %v1731
        %v1786 = vadd.f32 %v1584, %v1736
        %v1787 = vadd.f32 %v1585, %v1739
        %v1788 = vadd.f32 %v1586, %v1744
        %v1789 = vadd.f32 %v1587, %v1747
        %v1790 = vadd.f32 %v1588, %v1752
        %v1791 = vadd.f32 %v1589, %v1755
        %v1792 = vadd.f32 %v1590, %v1760
        %v1793 = vadd.f32 %v1591, %v1763
        %v1794 = vadd.f32 %v1592, %v1768
        %v1795 = vadd.f32 %v1593, %v1771
        %v1796 = vadd.f32 %v1594, %v1776
        %v1797 = vadd.f32 %v1595, %v1779
        %v1798 = vld [vmem:[%s1599] sm:$0xe]
        %v1799 = vld [vmem:[%s1599 + $0x4] sm:$0xf]
        %v1800 = vld [vmem:[%s1599 + $0x8] sm:$0x1]
        %v1801 = vld [vmem:[%s1599 + $0xc] sm:$0xe]
        %v1802 = vld [vmem:[%s1599 + $0x10] sm:$0xf]
        %v1803 = vld [vmem:[%s1599 + $0x14] sm:$0x1]
        %v1804 = vld [vmem:[%s1599 + $0x18] sm:$0xe]
        %v1805 = vld [vmem:[%s1599 + $0x1c] sm:$0xf]
        %v1806 = vld [vmem:[%s1599 + $0x20] sm:$0x1]
        %v1807 = vld [vmem:[%s1599 + $0x24] sm:$0xe]
        %v1808 = vld [vmem:[%s1599 + $0x28] sm:$0xf]
        %v1809 = vld [vmem:[%s1599 + $0x2c] sm:$0x1]
        %v1810 = vld [vmem:[%s1599 + $0x30] sm:$0xe]
        %v1811 = vld [vmem:[%s1599 + $0x34] sm:$0xf]
        %v1812 = vld [vmem:[%s1599 + $0x38] sm:$0x1]
        %v1813 = vld [vmem:[%s1599 + $0x3c] sm:$0xe]
        %v1814 = vld [vmem:[%s1599 + $0x40] sm:$0xf]
        %v1815 = vld [vmem:[%s1599 + $0x44] sm:$0x1]
        %v1816 = vld [vmem:[%s1599 + $0x48] sm:$0xe]
        %v1817 = vld [vmem:[%s1599 + $0x4c] sm:$0xf]
        %v1818 = vld [vmem:[%s1599 + $0x50] sm:$0x1]
        %v1819 = vld [vmem:[%s1599 + $0x54] sm:$0xe]
        %v1820 = vld [vmem:[%s1599 + $0x58] sm:$0xf]
        %v1821 = vld [vmem:[%s1599 + $0x5c] sm:$0x1]
        %v1846 = vrot.slane %v1798, 5
        %v1847 = vrot.slane %v1846, 4
        %v1848 = vrot.slane %v1799, 5
        %v1849 = vsel %vm248, %v1847, %v1848
        %v1850 = vrot.slane %v1848, 4
        %v1851 = vrot.slane %v1800, 5
        %v1852 = vsel %vm248, %v1850, %v1851
        %v1853 = vrot.slane %v1801, 5
        %v1854 = vrot.slane %v1853, 4
        %v1855 = vrot.slane %v1802, 5
        %v1856 = vsel %vm248, %v1854, %v1855
        %v1857 = vrot.slane %v1855, 4
        %v1858 = vrot.slane %v1803, 5
        %v1859 = vsel %vm248, %v1857, %v1858
        %v1860 = vrot.slane %v1804, 5
        %v1861 = vrot.slane %v1860, 4
        %v1862 = vrot.slane %v1805, 5
        %v1863 = vsel %vm248, %v1861, %v1862
        %v1864 = vrot.slane %v1862, 4
        %v1865 = vrot.slane %v1806, 5
        %v1866 = vsel %vm248, %v1864, %v1865
        %v1867 = vrot.slane %v1807, 5
        %v1868 = vrot.slane %v1867, 4
        %v1869 = vrot.slane %v1808, 5
        %v1870 = vsel %vm248, %v1868, %v1869
        %v1871 = vrot.slane %v1869, 4
        %v1872 = vrot.slane %v1809, 5
        %v1873 = vsel %vm248, %v1871, %v1872
        %v1874 = vrot.slane %v1810, 5
        %v1875 = vrot.slane %v1874, 4
        %v1876 = vrot.slane %v1811, 5
        %v1877 = vsel %vm248, %v1875, %v1876
        %v1878 = vrot.slane %v1876, 4
        %v1879 = vrot.slane %v1812, 5
        %v1880 = vsel %vm248, %v1878, %v1879
        %v1881 = vrot.slane %v1813, 5
        %v1882 = vrot.slane %v1881, 4
        %v1883 = vrot.slane %v1814, 5
        %v1884 = vsel %vm248, %v1882, %v1883
        %v1885 = vrot.slane %v1883, 4
        %v1886 = vrot.slane %v1815, 5
        %v1887 = vsel %vm248, %v1885, %v1886
        %v1888 = vrot.slane %v1816, 5
        %v1889 = vrot.slane %v1888, 4
        %v1890 = vrot.slane %v1817, 5
        %v1891 = vsel %vm248, %v1889, %v1890
        %v1892 = vrot.slane %v1890, 4
        %v1893 = vrot.slane %v1818, 5
        %v1894 = vsel %vm248, %v1892, %v1893
        %v1895 = vrot.slane %v1819, 5
        %v1896 = vrot.slane %v1895, 4
        %v1897 = vrot.slane %v1820, 5
        %v1898 = vsel %vm248, %v1896, %v1897
        %v1899 = vrot.slane %v1897, 4
        %v1900 = vrot.slane %v1821, 5
        %v1901 = vsel %vm248, %v1899, %v1900
        %s1902 = scalar_lea.vmem %s1, 14
        %v1903 = vld [vmem:[%s1902] sm:$0x3]
        %v1904 = vunpack.c.l.b16 %v1849
        %v1905 = vunpack.c.l.b16 %v1852
        %v1906 = vunpack.c.l.b16 %v1856
        %v1907 = vunpack.c.l.b16 %v1859
        %v1908 = vunpack.c.l.b16 %v1863
        %v1909 = vunpack.c.l.b16 %v1866
        %v1910 = vunpack.c.l.b16 %v1870
        %v1911 = vunpack.c.l.b16 %v1873
        %v1912 = vunpack.c.l.b16 %v1877
        %v1913 = vunpack.c.l.b16 %v1880
        %v1914 = vunpack.c.l.b16 %v1884
        %v1915 = vunpack.c.l.b16 %v1887
        %v1916 = vunpack.c.l.b16 %v1891
        %v1917 = vunpack.c.l.b16 %v1894
        %v1918 = vunpack.c.l.b16 %v1898
        %v1919 = vunpack.c.l.b16 %v1901
        %v1920 = vpack.c.b16 %v1905, %v1904
        %v1921 = vpack.c.b16 %v1907, %v1906
        %v1922 = vpack.c.b16 %v1909, %v1908
        %v1923 = vpack.c.b16 %v1911, %v1910
        %v1924 = vpack.c.b16 %v1913, %v1912
        %v1925 = vpack.c.b16 %v1915, %v1914
        %v1926 = vpack.c.b16 %v1917, %v1916
        %v1927 = vpack.c.b16 %v1919, %v1918
        %v1929 = vsel %vm331, %v1920, 0
        %v1932 = vsel %vm331, %v1921, 0
        %v1935 = vsel %vm331, %v1922, 0
        %v1938 = vsel %vm331, %v1923, 0
        %v1941 = vsel %vm331, %v1924, 0
        %v1944 = vsel %vm331, %v1925, 0
        %v1947 = vsel %vm331, %v1926, 0
        %v1950 = vsel %vm331, %v1927, 0
        %v1953 = vsel %vm356, %v1903, 0
        %1955 = vmatprep.subr.bf16.mxu0 0
        %1956 = vmatpush1.bf16.msra.mxu0 %v1953
        %1957 = vmatprep.subr.bf16.mxu0 0
        %1958 = vmatpush1.bf16.msra.mxu0 0
        %1959 = vmatprep.subr.bf16.mxu0 0
        %1960 = vmatpush1.bf16.msra.mxu0 0
        %1961 = vmatprep.subr.bf16.mxu0 0
        %1962 = vmatpush1.bf16.msra.mxu0 0
        %1963 = vmatprep.subr.bf16.mxu0 0
        %1964 = vmatpush1.bf16.msra.mxu0 0
        %1965 = vmatprep.subr.bf16.mxu0 0
        %1966 = vmatpush1.bf16.msra.mxu0 0
        %1967 = vmatprep.subr.bf16.mxu0 0
        %1968 = vmatpush1.bf16.msra.mxu0 0
        %1969 = vmatprep.subr.bf16.mxu0 0
        %1970 = vmatpush1.bf16.msra.mxu0 0
        %1971 = vmatprep.subr.bf16.mxu0 0
        %1972 = vmatpush1.bf16.msra.mxu0 0
        %1973 = vmatprep.subr.bf16.mxu0 0
        %1974 = vmatpush1.bf16.msra.mxu0 0
        %1975 = vmatprep.subr.bf16.mxu0 0
        %1976 = vmatpush1.bf16.msra.mxu0 0
        %1977 = vmatprep.subr.bf16.mxu0 0
        %1978 = vmatpush1.bf16.msra.mxu0 0
        %1979 = vmatprep.subr.bf16.mxu0 0
        %1980 = vmatpush1.bf16.msra.mxu0 0
        %1981 = vmatprep.subr.bf16.mxu0 0
        %1982 = vmatpush1.bf16.msra.mxu0 0
        %1983 = vmatprep.subr.bf16.mxu0 0
        %1984 = vmatpush1.bf16.msra.mxu0 0
        %1985 = vmatprep.subr.bf16.mxu0 0
        %1986 = vmatpush1.bf16.msra.mxu0 0
        %1987 = vmatprep.mubr.bf16.mxu0 0
        %1988 = vmatmul.mubr.bf16.gmra.mrb[0].mxu0 %v1929
        %v1989 = vpop.f32.mrb[0].mxu0
        %v1990 = vadd.f32 0.0, %v1989
        %v1991 = vpop.f32.mrb[0].mxu0
        %v1992 = vpop.f32.mrb[0].mxu0
        %v1993 = vadd.f32 0.0, %v1992
        %v1994 = vpop.f32.mrb[0].mxu0
        %1995 = vmatprep.mubr.bf16.mxu0 0
        %1996 = vmatmul.mubr.bf16.gmra.mrb[0].mxu0 %v1932
        %v1997 = vpop.f32.mrb[0].mxu0
        %v1998 = vadd.f32 0.0, %v1997
        %v1999 = vpop.f32.mrb[0].mxu0
        %v2000 = vpop.f32.mrb[0].mxu0
        %v2001 = vadd.f32 0.0, %v2000
        %v2002 = vpop.f32.mrb[0].mxu0
        %2003 = vmatprep.mubr.bf16.mxu0 0
        %2004 = vmatmul.mubr.bf16.gmra.mrb[0].mxu0 %v1935
        %v2005 = vpop.f32.mrb[0].mxu0
        %v2006 = vadd.f32 0.0, %v2005
        %v2007 = vpop.f32.mrb[0].mxu0
        %v2008 = vpop.f32.mrb[0].mxu0
        %v2009 = vadd.f32 0.0, %v2008
        %v2010 = vpop.f32.mrb[0].mxu0
        %2011 = vmatprep.mubr.bf16.mxu0 0
        %2012 = vmatmul.mubr.bf16.gmra.mrb[0].mxu0 %v1938
        %v2013 = vpop.f32.mrb[0].mxu0
        %v2014 = vadd.f32 0.0, %v2013
        %v2015 = vpop.f32.mrb[0].mxu0
        %v2016 = vpop.f32.mrb[0].mxu0
        %v2017 = vadd.f32 0.0, %v2016
        %v2018 = vpop.f32.mrb[0].mxu0
        %2019 = vmatprep.mubr.bf16.mxu0 0
        %2020 = vmatmul.mubr.bf16.gmra.mrb[0].mxu0 %v1941
        %v2021 = vpop.f32.mrb[0].mxu0
        %v2022 = vadd.f32 0.0, %v2021
        %v2023 = vpop.f32.mrb[0].mxu0
        %v2024 = vpop.f32.mrb[0].mxu0
        %v2025 = vadd.f32 0.0, %v2024
        %v2026 = vpop.f32.mrb[0].mxu0
        %2027 = vmatprep.mubr.bf16.mxu0 0
        %2028 = vmatmul.mubr.bf16.gmra.mrb[0].mxu0 %v1944
        %v2029 = vpop.f32.mrb[0].mxu0
        %v2030 = vadd.f32 0.0, %v2029
        %v2031 = vpop.f32.mrb[0].mxu0
        %v2032 = vpop.f32.mrb[0].mxu0
        %v2033 = vadd.f32 0.0, %v2032
        %v2034 = vpop.f32.mrb[0].mxu0
        %2035 = vmatprep.mubr.bf16.mxu0 0
        %2036 = vmatmul.mubr.bf16.gmra.mrb[0].mxu0 %v1947
        %v2037 = vpop.f32.mrb[0].mxu0
        %v2038 = vadd.f32 0.0, %v2037
        %v2039 = vpop.f32.mrb[0].mxu0
        %v2040 = vpop.f32.mrb[0].mxu0
        %v2041 = vadd.f32 0.0, %v2040
        %v2042 = vpop.f32.mrb[0].mxu0
        %2043 = vmatprep.mubr.bf16.mxu0 0
        %2044 = vmatmul.mubr.bf16.gmra.mrb[0].mxu0 %v1950
        %v2045 = vpop.f32.mrb[0].mxu0
        %v2046 = vadd.f32 0.0, %v2045
        %v2047 = vpop.f32.mrb[0].mxu0
        %v2048 = vpop.f32.mrb[0].mxu0
        %v2049 = vadd.f32 0.0, %v2048
        %v2050 = vpop.f32.mrb[0].mxu0
        %2051 = vdwg.mxu0
        %v2052 = vadd.f32 %v1782, %v1990
        %v2053 = vadd.f32 %v1783, %v1993
        %v2054 = vadd.f32 %v1784, %v1998
        %v2055 = vadd.f32 %v1785, %v2001
        %v2056 = vadd.f32 %v1786, %v2006
        %v2057 = vadd.f32 %v1787, %v2009
        %v2058 = vadd.f32 %v1788, %v2014
        %v2059 = vadd.f32 %v1789, %v2017
        %v2060 = vadd.f32 %v1790, %v2022
        %v2061 = vadd.f32 %v1791, %v2025
        %v2062 = vadd.f32 %v1792, %v2030
        %v2063 = vadd.f32 %v1793, %v2033
        %v2064 = vadd.f32 %v1794, %v2038
        %v2065 = vadd.f32 %v1795, %v2041
        %v2066 = vadd.f32 %v1796, %v2046
        %v2067 = vadd.f32 %v1797, %v2049
        %v2068 = vld [vmem:[%s1599] sm:$0xc]
        %v2069 = vld [vmem:[%s1599 + $0x8] sm:$0x3]
        %v2070 = vld [vmem:[%s1599 + $0xc] sm:$0xc]
        %v2071 = vld [vmem:[%s1599 + $0x14] sm:$0x3]
        %v2072 = vld [vmem:[%s1599 + $0x18] sm:$0xc]
        %v2073 = vld [vmem:[%s1599 + $0x20] sm:$0x3]
        %v2074 = vld [vmem:[%s1599 + $0x24] sm:$0xc]
        %v2075 = vld [vmem:[%s1599 + $0x2c] sm:$0x3]
        %v2076 = vld [vmem:[%s1599 + $0x30] sm:$0xc]
        %v2077 = vld [vmem:[%s1599 + $0x38] sm:$0x3]
        %v2078 = vld [vmem:[%s1599 + $0x3c] sm:$0xc]
        %v2079 = vld [vmem:[%s1599 + $0x44] sm:$0x3]
        %v2080 = vld [vmem:[%s1599 + $0x48] sm:$0xc]
        %v2081 = vld [vmem:[%s1599 + $0x50] sm:$0x3]
        %v2082 = vld [vmem:[%s1599 + $0x54] sm:$0xc]
        %v2083 = vld [vmem:[%s1599 + $0x5c] sm:$0x3]
        %v2100 = vrot.slane %v2068, 6
        %v2101 = vrot.slane %v2100, 4
        %v2102 = vrot.slane %v1799, 6
        %v2103 = vsel %vm647, %v2101, %v2102
        %v2104 = vrot.slane %v2102, 4
        %v2105 = vrot.slane %v2069, 6
        %v2106 = vsel %vm647, %v2104, %v2105
        %v2107 = vrot.slane %v2070, 6
        %v2108 = vrot.slane %v2107, 4
        %v2109 = vrot.slane %v1802, 6
        %v2110 = vsel %vm647, %v2108, %v2109
        %v2111 = vrot.slane %v2109, 4
        %v2112 = vrot.slane %v2071, 6
        %v2113 = vsel %vm647, %v2111, %v2112
        %v2114 = vrot.slane %v2072, 6
        %v2115 = vrot.slane %v2114, 4
        %v2116 = vrot.slane %v1805, 6
        %v2117 = vsel %vm647, %v2115, %v2116
        %v2118 = vrot.slane %v2116, 4
        %v2119 = vrot.slane %v2073, 6
        %v2120 = vsel %vm647, %v2118, %v2119
        %v2121 = vrot.slane %v2074, 6
        %v2122 = vrot.slane %v2121, 4
        %v2123 = vrot.slane %v1808, 6
        %v2124 = vsel %vm647, %v2122, %v2123
        %v2125 = vrot.slane %v2123, 4
        %v2126 = vrot.slane %v2075, 6
        %v2127 = vsel %vm647, %v2125, %v2126
        %v2128 = vrot.slane %v2076, 6
        %v2129 = vrot.slane %v2128, 4
        %v2130 = vrot.slane %v1811, 6
        %v2131 = vsel %vm647, %v2129, %v2130
        %v2132 = vrot.slane %v2130, 4
        %v2133 = vrot.slane %v2077, 6
        %v2134 = vsel %vm647, %v2132, %v2133
        %v2135 = vrot.slane %v2078, 6
        %v2136 = vrot.slane %v2135, 4
        %v2137 = vrot.slane %v1814, 6
        %v2138 = vsel %vm647, %v2136, %v2137
        %v2139 = vrot.slane %v2137, 4
        %v2140 = vrot.slane %v2079, 6
        %v2141 = vsel %vm647, %v2139, %v2140
        %v2142 = vrot.slane %v2080, 6
        %v2143 = vrot.slane %v2142, 4
        %v2144 = vrot.slane %v1817, 6
        %v2145 = vsel %vm647, %v2143, %v2144
        %v2146 = vrot.slane %v2144, 4
        %v2147 = vrot.slane %v2081, 6
        %v2148 = vsel %vm647, %v2146, %v2147
        %v2149 = vrot.slane %v2082, 6
        %v2150 = vrot.slane %v2149, 4
        %v2151 = vrot.slane %v1820, 6
        %v2152 = vsel %vm647, %v2150, %v2151
        %v2153 = vrot.slane %v2151, 4
        %v2154 = vrot.slane %v2083, 6
        %v2155 = vsel %vm647, %v2153, %v2154
        %s2156 = scalar_lea.vmem %s1, 16
        %v2157 = vld [vmem:[%s2156] sm:$0x3]
        %v2158 = vunpack.c.l.b16 %v2103
        %v2159 = vunpack.c.l.b16 %v2106
        %v2160 = vunpack.c.l.b16 %v2110
        %v2161 = vunpack.c.l.b16 %v2113
        %v2162 = vunpack.c.l.b16 %v2117
        %v2163 = vunpack.c.l.b16 %v2120
        %v2164 = vunpack.c.l.b16 %v2124
        %v2165 = vunpack.c.l.b16 %v2127
        %v2166 = vunpack.c.l.b16 %v2131
        %v2167 = vunpack.c.l.b16 %v2134
        %v2168 = vunpack.c.l.b16 %v2138
        %v2169 = vunpack.c.l.b16 %v2141
        %v2170 = vunpack.c.l.b16 %v2145
        %v2171 = vunpack.c.l.b16 %v2148
        %v2172 = vunpack.c.l.b16 %v2152
        %v2173 = vunpack.c.l.b16 %v2155
        %v2174 = vpack.c.b16 %v2159, %v2158
        %v2175 = vpack.c.b16 %v2161, %v2160
        %v2176 = vpack.c.b16 %v2163, %v2162
        %v2177 = vpack.c.b16 %v2165, %v2164
        %v2178 = vpack.c.b16 %v2167, %v2166
        %v2179 = vpack.c.b16 %v2169, %v2168
        %v2180 = vpack.c.b16 %v2171, %v2170
        %v2181 = vpack.c.b16 %v2173, %v2172
        %v2183 = vsel %vm331, %v2174, 0
        %v2186 = vsel %vm331, %v2175, 0
        %v2189 = vsel %vm331, %v2176, 0
        %v2192 = vsel %vm331, %v2177, 0
        %v2195 = vsel %vm331, %v2178, 0
        %v2198 = vsel %vm331, %v2179, 0
        %v2201 = vsel %vm331, %v2180, 0
        %v2204 = vsel %vm331, %v2181, 0
        %v2207 = vsel %vm356, %v2157, 0
        %2209 = vmatprep.subr.bf16.mxu0 0
        %2210 = vmatpush1.bf16.msra.mxu0 %v2207
        %2211 = vmatprep.subr.bf16.mxu0 0
        %2212 = vmatpush1.bf16.msra.mxu0 0
        %2213 = vmatprep.subr.bf16.mxu0 0
        %2214 = vmatpush1.bf16.msra.mxu0 0
        %2215 = vmatprep.subr.bf16.mxu0 0
        %2216 = vmatpush1.bf16.msra.mxu0 0
        %2217 = vmatprep.subr.bf16.mxu0 0
        %2218 = vmatpush1.bf16.msra.mxu0 0
        %2219 = vmatprep.subr.bf16.mxu0 0
        %2220 = vmatpush1.bf16.msra.mxu0 0
        %2221 = vmatprep.subr.bf16.mxu0 0
        %2222 = vmatpush1.bf16.msra.mxu0 0
        %2223 = vmatprep.subr.bf16.mxu0 0
        %2224 = vmatpush1.bf16.msra.mxu0 0
        %2225 = vmatprep.subr.bf16.mxu0 0
        %2226 = vmatpush1.bf16.msra.mxu0 0
        %2227 = vmatprep.subr.bf16.mxu0 0
        %2228 = vmatpush1.bf16.msra.mxu0 0
        %2229 = vmatprep.subr.bf16.mxu0 0
        %2230 = vmatpush1.bf16.msra.mxu0 0
        %2231 = vmatprep.subr.bf16.mxu0 0
        %2232 = vmatpush1.bf16.msra.mxu0 0
        %2233 = vmatprep.subr.bf16.mxu0 0
        %2234 = vmatpush1.bf16.msra.mxu0 0
        %2235 = vmatprep.subr.bf16.mxu0 0
        %2236 = vmatpush1.bf16.msra.mxu0 0
        %2237 = vmatprep.subr.bf16.mxu0 0
        %2238 = vmatpush1.bf16.msra.mxu0 0
        %2239 = vmatprep.subr.bf16.mxu0 0
        %2240 = vmatpush1.bf16.msra.mxu0 0
        %2241 = vmatprep.mubr.bf16.mxu0 0
        %2242 = vmatmul.mubr.bf16.gmra.mrb[0].mxu0 %v2183
        %v2243 = vpop.f32.mrb[0].mxu0
        %v2244 = vadd.f32 0.0, %v2243
        %v2245 = vpop.f32.mrb[0].mxu0
        %v2246 = vpop.f32.mrb[0].mxu0
        %v2247 = vadd.f32 0.0, %v2246
        %v2248 = vpop.f32.mrb[0].mxu0
        %2249 = vmatprep.mubr.bf16.mxu0 0
        %2250 = vmatmul.mubr.bf16.gmra.mrb[0].mxu0 %v2186
        %v2251 = vpop.f32.mrb[0].mxu0
        %v2252 = vadd.f32 0.0, %v2251
        %v2253 = vpop.f32.mrb[0].mxu0
        %v2254 = vpop.f32.mrb[0].mxu0
        %v2255 = vadd.f32 0.0, %v2254
        %v2256 = vpop.f32.mrb[0].mxu0
        %2257 = vmatprep.mubr.bf16.mxu0 0
        %2258 = vmatmul.mubr.bf16.gmra.mrb[0].mxu0 %v2189
        %v2259 = vpop.f32.mrb[0].mxu0
        %v2260 = vadd.f32 0.0, %v2259
        %v2261 = vpop.f32.mrb[0].mxu0
        %v2262 = vpop.f32.mrb[0].mxu0
        %v2263 = vadd.f32 0.0, %v2262
        %v2264 = vpop.f32.mrb[0].mxu0
        %2265 = vmatprep.mubr.bf16.mxu0 0
        %2266 = vmatmul.mubr.bf16.gmra.mrb[0].mxu0 %v2192
        %v2267 = vpop.f32.mrb[0].mxu0
        %v2268 = vadd.f32 0.0, %v2267
        %v2269 = vpop.f32.mrb[0].mxu0
        %v2270 = vpop.f32.mrb[0].mxu0
        %v2271 = vadd.f32 0.0, %v2270
        %v2272 = vpop.f32.mrb[0].mxu0
        %2273 = vmatprep.mubr.bf16.mxu0 0
        %2274 = vmatmul.mubr.bf16.gmra.mrb[0].mxu0 %v2195
        %v2275 = vpop.f32.mrb[0].mxu0
        %v2276 = vadd.f32 0.0, %v2275
        %v2277 = vpop.f32.mrb[0].mxu0
        %v2278 = vpop.f32.mrb[0].mxu0
        %v2279 = vadd.f32 0.0, %v2278
        %v2280 = vpop.f32.mrb[0].mxu0
        %2281 = vmatprep.mubr.bf16.mxu0 0
        %2282 = vmatmul.mubr.bf16.gmra.mrb[0].mxu0 %v2198
        %v2283 = vpop.f32.mrb[0].mxu0
        %v2284 = vadd.f32 0.0, %v2283
        %v2285 = vpop.f32.mrb[0].mxu0
        %v2286 = vpop.f32.mrb[0].mxu0
        %v2287 = vadd.f32 0.0, %v2286
        %v2288 = vpop.f32.mrb[0].mxu0
        %2289 = vmatprep.mubr.bf16.mxu0 0
        %2290 = vmatmul.mubr.bf16.gmra.mrb[0].mxu0 %v2201
        %v2291 = vpop.f32.mrb[0].mxu0
        %v2292 = vadd.f32 0.0, %v2291
        %v2293 = vpop.f32.mrb[0].mxu0
        %v2294 = vpop.f32.mrb[0].mxu0
        %v2295 = vadd.f32 0.0, %v2294
        %v2296 = vpop.f32.mrb[0].mxu0
        %2297 = vmatprep.mubr.bf16.mxu0 0
        %2298 = vmatmul.mubr.bf16.gmra.mrb[0].mxu0 %v2204
        %v2299 = vpop.f32.mrb[0].mxu0
        %v2300 = vadd.f32 0.0, %v2299
        %v2301 = vpop.f32.mrb[0].mxu0
        %v2302 = vpop.f32.mrb[0].mxu0
        %v2303 = vadd.f32 0.0, %v2302
        %v2304 = vpop.f32.mrb[0].mxu0
        %2305 = vdwg.mxu0
        %v2306 = vadd.f32 %v2052, %v2244
        %v2307 = vadd.f32 %v2053, %v2247
        %v2308 = vadd.f32 %v2054, %v2252
        %v2309 = vadd.f32 %v2055, %v2255
        %v2310 = vadd.f32 %v2056, %v2260
        %v2311 = vadd.f32 %v2057, %v2263
        %v2312 = vadd.f32 %v2058, %v2268
        %v2313 = vadd.f32 %v2059, %v2271
        %v2314 = vadd.f32 %v2060, %v2276
        %v2315 = vadd.f32 %v2061, %v2279
        %v2316 = vadd.f32 %v2062, %v2284
        %v2317 = vadd.f32 %v2063, %v2287
        %v2318 = vadd.f32 %v2064, %v2292
        %v2319 = vadd.f32 %v2065, %v2295
        %v2320 = vadd.f32 %v2066, %v2300
        %v2321 = vadd.f32 %v2067, %v2303
        %v2322 = vld [vmem:[%s2] sm:$0x1]
        %v2324 = vlaneseq
        %v2325 = vshrl.u32 %v2324, 7
        %v2326 = vsub.s32 0, %v2325
        %v2327 = vrot.slane %v2322, %v2326
        %v2329 = vadd.f32 %v2306, %v2327
        %v2330 = vadd.f32 %v2307, %v2327
        %v2331 = vadd.f32 %v2308, %v2327
        %v2332 = vadd.f32 %v2309, %v2327
        %v2333 = vadd.f32 %v2310, %v2327
        %v2334 = vadd.f32 %v2311, %v2327
        %v2335 = vadd.f32 %v2312, %v2327
        %v2336 = vadd.f32 %v2313, %v2327
        %v2337 = vadd.f32 %v2314, %v2327
        %v2338 = vadd.f32 %v2315, %v2327
        %v2339 = vadd.f32 %v2316, %v2327
        %v2340 = vadd.f32 %v2317, %v2327
        %v2341 = vadd.f32 %v2318, %v2327
        %v2342 = vadd.f32 %v2319, %v2327
        %v2343 = vadd.f32 %v2320, %v2327
        %v2344 = vadd.f32 %v2321, %v2327
        %v2345 = vmax.f32 %v2329, 0.0
        %v2346 = vmax.f32 %v2330, 0.0
        %v2347 = vmax.f32 %v2331, 0.0
        %v2348 = vmax.f32 %v2332, 0.0
        %v2349 = vmax.f32 %v2333, 0.0
        %v2350 = vmax.f32 %v2334, 0.0
        %v2351 = vmax.f32 %v2335, 0.0
        %v2352 = vmax.f32 %v2336, 0.0
        %v2353 = vmax.f32 %v2337, 0.0
        %v2354 = vmax.f32 %v2338, 0.0
        %v2355 = vmax.f32 %v2339, 0.0
        %v2356 = vmax.f32 %v2340, 0.0
        %v2357 = vmax.f32 %v2341, 0.0
        %v2358 = vmax.f32 %v2342, 0.0
        %v2359 = vmax.f32 %v2343, 0.0
        %v2360 = vmax.f32 %v2344, 0.0
        %2361 = vst [vmem:[%s177] sm:$0xff] %v2345
        %2362 = vst [vmem:[%s177 + $0x8] sm:$0xff] %v2346
        %2363 = vst [vmem:[%s177 + $0x10] sm:$0xff] %v2347
        %2364 = vst [vmem:[%s177 + $0x18] sm:$0xff] %v2348
        %2365 = vst [vmem:[%s177 + $0x20] sm:$0xff] %v2349
        %2366 = vst [vmem:[%s177 + $0x28] sm:$0xff] %v2350
        %2367 = vst [vmem:[%s177 + $0x30] sm:$0xff] %v2351
        %2368 = vst [vmem:[%s177 + $0x38] sm:$0xff] %v2352
        %2369 = vst [vmem:[%s177 + $0x40] sm:$0xff] %v2353
        %2370 = vst [vmem:[%s177 + $0x48] sm:$0xff] %v2354
        %2371 = vst [vmem:[%s177 + $0x50] sm:$0xff] %v2355
        %2372 = vst [vmem:[%s177 + $0x58] sm:$0xff] %v2356
        %2373 = vst [vmem:[%s177 + $0x60] sm:$0xff] %v2357
        %2374 = vst [vmem:[%s177 + $0x68] sm:$0xff] %v2358
        %2375 = vst [vmem:[%s177 + $0x70] sm:$0xff] %v2359
        %2376 = vst [vmem:[%s177 + $0x78] sm:$0xff] %v2360
        %s2377 = sand.u32 %s107, 1
        %s2378 = scalar_lea.sflag [#allocation3], %s2377
        %s2379 = sand.u32 %s107, 1
        %s2380 = smul.addr %s2379, 128
        %s2381 = scalar_lea.vmem [#allocation2], %s2380
        // Predicated region
        $region33: #{tpu_custom_call.1} parent=31 // pred_check
          %p2382 = pneg %p117
        $region34: #{tpu_custom_call.1} parent=31 // pred_check_branch
          %2384 = sbr.rel (%p2382) target = $region36
        $region35: #{tpu_custom_call.1} parent=31 // pred_region
          %s2385 = smul.u32 8, %s22
          %s2387 = ssub.s32 2048, 2048
          %2388 = vsyncadd %s2378, %s2387
          %s2389 = smul.addr %s2385, 2
          %s2390 = smul.addr %s21, 32
          %s2391 = sadd.s32 %s2389, %s2390
          %s2392 = smul.addr %s2391, 128
          %s2393 = scalar_lea.hbm %s3, %s2392
          %s2394 = sshll.u32 %s2381, 4
          %s2395 = int_to_ptr.vmem [resolvable:$true] %s2394
          %2400 = dma.vmem_to_hbm [thread:$0]  %s2395, 2048, %s2393, %s2378, 128, 128, 8
        $region36: #{tpu_custom_call.1} parent=31 // pred_fallthru
          _
      $region32: #{tpu_custom_call.1} parent=5 // pred_fallthru
        _
      %p2401 = scmp.le.s32.totalorder 2, %s12
      // Predicated region
      $region37: #{tpu_custom_call.1} parent=5 // pred_check
        %p2402 = pneg %p2401
      $region38: #{tpu_custom_call.1} parent=5 // pred_check_branch
        %2404 = sbr.rel (%p2402) target = $region40
      $region39: #{tpu_custom_call.1} parent=5 // pred_region
        %s2405 = ssub.s32 %s12, 2
        // Predicated region
        $region41: #{tpu_custom_call.1} parent=39 // pred_check
          %p2406 = pneg %p123
        $region42: #{tpu_custom_call.1} parent=39 // pred_check_branch
          %2408 = sbr.rel (%p2406) target = $region44
        $region43: #{tpu_custom_call.1} parent=39 // pred_region
          %s2409 = sand.u32 %s108, 1
          %s2410 = scalar_lea.sflag [#allocation3], %s2409
          %s2411 = sand.u32 %s108, 1
          %s2412 = smul.addr %s2411, 128
          %s2413 = scalar_lea.vmem [#allocation2], %s2412
          %2414 = dma.done %s2410, 2048
        $region44: #{tpu_custom_call.1} parent=39 // pred_fallthru
          _
      $region40: #{tpu_custom_call.1} parent=5 // pred_fallthru
        _
    $region6: #{tpu_custom_call.1} parent=1 // loop_footer
      %s16 = sadd.s32 1, %s12
    $region7: #{tpu_custom_call.1} parent=1 // loop_footer_branch
      %11 = sbr.rel target = $region3
    $region8: #{tpu_custom_call.1} parent=1 // loop_exit
      _
    %2415 = vsyncpa [#allocation3], 1
    %s2416 = scalar_lea.sflag [#allocation3], 1
    %2417 = vsyncpa %s2416, 1

</llo_original>
